<compile_context>
chip_gen: v5e
topology: v5e:2x2
jax: 0.10.0
libtpu: 0.0.40
codegen_flags: <defaults>
</compile_context>

<pallas_src>
import functools

import jax
import jax.numpy as jnp
from jax.experimental import pallas as pl
from jax.experimental.pallas import tpu as pltpu

D_IN, H1, H2, D_OUT = 784, 512, 128, 10
K_PAD = 896     # 784 padded up to 7 * 128 lanes
OUT_PAD = 128   # 10 padded up to one full lane tile (lane-dense output stores)
P_DROP1, P_DROP2 = 0.3, 0.5

# murmur3 constants as wrapped int32 values.
_M1 = -1640531527    # 0x9E3779B9
_M2 = -2048144789    # 0x85EBCA6B
_M3 = -1028477387    # 0xC2B2AE35


def _lsr(x, n):
    """Logical shift right for int32 vectors (arithmetic shift + mask)."""
    return jnp.bitwise_and(jnp.right_shift(x, n),
                           jnp.int32((1 << (32 - n)) - 1))


def _hash_u24(shape, salt):
    """Counter-based hash -> uniform 24-bit ints; pure int32 VPU ops."""
    i = jax.lax.broadcasted_iota(jnp.int32, shape, 0)
    j = jax.lax.broadcasted_iota(jnp.int32, shape, 1)
    x = i * jnp.int32(_M1) + j * jnp.int32(_M2) + salt
    # murmur3 fmix32 finalizer (avalanches all bits).
    x = x ^ _lsr(x, 16)
    x = x * jnp.int32(_M2)
    x = x ^ _lsr(x, 13)
    x = x * jnp.int32(_M3)
    x = x ^ _lsr(x, 16)
    return jnp.bitwise_and(x, jnp.int32(0x00FFFFFF))


def _dropout_select(h, p, salt):
    """Pure keep/zero select. The 1/(1-p) scale is folded into the NEXT layer's
    weights at pack time (pack_params(training=True)), so no multiply here."""
    r = _hash_u24(h.shape, salt)
    thresh = jnp.int32(int(p * (1 << 24)))
    keep = r >= thresh                      # P(keep) = 1 - p
    return jnp.where(keep, h, 0.0)


def mlp_kernel(*refs, training):
    if training:
        (seed_ref, x_ref, w1_ref, b1_ref, w2_ref, b2_ref,
         w3_ref, b3_ref, o_ref) = refs
        # Distinct stream per batch tile; caller must mix a step counter into
        # `seed` across training steps to decorrelate masks over time.
        salt0 = (seed_ref[0] * jnp.int32(1000003)
                 + pl.program_id(0) * jnp.int32(7919))
    else:
        (x_ref, w1_ref, b1_ref, w2_ref, b2_ref,
         w3_ref, b3_ref, o_ref) = refs

    cdt = w1_ref.dtype  # MXU input dtype (f32 or bf16); accumulation is f32.

    # Layer 1: (T, 896) @ (896, 512) + b1, ReLU. x is already in `cdt`;
    # padded K rows of w1 are zero so the padding contributes nothing.
    h1 = jnp.dot(x_ref[...], w1_ref[...], preferred_element_type=jnp.float32)
    h1 = jnp.maximum(h1 + b1_ref[...], 0.0)
    if training:
        h1 = _dropout_select(h1, P_DROP1, salt0 + jnp.int32(0x05851F42))

    # Layer 2: (T, 512) @ (512, 128) + b2, ReLU.
    h2 = jnp.dot(h1.astype(cdt), w2_ref[...], preferred_element_type=jnp.float32)
    h2 = jnp.maximum(h2 + b2_ref[...], 0.0)
    if training:
        h2 = _dropout_select(h2, P_DROP2, salt0 + jnp.int32(0x02545F49))

    # Layer 3: (T, 128) @ (128, 128) + b3  (cols 10..127 are zero padding).
    out = jnp.dot(h2.astype(cdt), w3_ref[...], preferred_element_type=jnp.float32)
    o_ref[...] = (out + b3_ref[...]).astype(o_ref.dtype)


def _pick_batch_tile(batch):
    """Per-generation-friendly default tile:
    - small batches: one tile (grid=1, no per-step overhead on v5e/v6e),
    - large batches: 256-row tiles so each v7x TensorCore gets >=2 tiles and
      the duplicated weight DMA is amortized."""
    b8 = ((batch + 7) // 8) * 8
    return b8 if b8 <= 512 else 256


def _weight_spec(shape, index_map):
    """Grid-invariant block (constant index_map): request single buffering to
    halve its VMEM footprint where pipeline_mode is supported."""
    if hasattr(pl, "Buffered"):
        try:
            return pl.BlockSpec(shape, index_map, pipeline_mode=pl.Buffered(1))
        except TypeError:
            pass
    return pl.BlockSpec(shape, index_map)


def mnist_net_forward(x, packed, *, batch_tile=None, training=False, seed=0,
                      out_dtype=jnp.float32):
    """Fused 3-layer MLP forward.

    x: (B, 784) array; packed: dict from pack_params(). In training mode, pass
    packed params built with pack_params(..., training=True) (dropout scale is
    folded into w2/w3) and mix a step counter into `seed` across steps.
    """
    B, d_in = x.shape
    assert d_in == D_IN
    if batch_tile is None:
        batch_tile = _pick_batch_tile(B)
    assert batch_tile % 8 == 0, "batch_tile must be a multiple of the sublane (8)"

    w1, b1 = packed["w1"], packed["b1"]
    w2, b2 = packed["w2"], packed["b2"]
    w3, b3 = packed["w3"], packed["b3"]
    cdt = w1.dtype

    n_tiles = pl.cdiv(B, batch_tile)
    b_pad = n_tiles * batch_tile
    # Single fused pad+cast: x reaches the kernel already in the compute dtype
    # (halves the dominant x DMA when weights are bf16; no in-kernel cast).
    x_pad = jnp.pad(x.astype(cdt), ((0, b_pad - B), (0, K_PAD - D_IN)))

    def x_map(i, *_):        # *_ absorbs the scalar-prefetch ref in training mode
        return (i, 0)

    def rep_map(i, *_):      # weights / biases: same block for every tile
        return (0, 0)

    in_specs = [
        pl.BlockSpec((batch_tile, K_PAD), x_map),
        _weight_spec(w1.shape, rep_map),
        _weight_spec(b1.shape, rep_map),
        _weight_spec(w2.shape, rep_map),
        _weight_spec(b2.shape, rep_map),
        _weight_spec(w3.shape, rep_map),
        _weight_spec(b3.shape, rep_map),
    ]
    out_specs = pl.BlockSpec((batch_tile, OUT_PAD), x_map)

    def nbytes(a):
        return a.size * a.dtype.itemsize

    flops = 2 * b_pad * (K_PAD * H1 + H1 * H2 + H2 * OUT_PAD)
    bytes_accessed = (nbytes(x_pad)
                      + sum(nbytes(a) for a in (w1, b1, w2, b2, w3, b3))
                      + b_pad * OUT_PAD * jnp.dtype(out_dtype).itemsize)
    cost = pl.CostEstimate(flops=flops, transcendentals=0,
                           bytes_accessed=bytes_accessed)

    num_prefetch = 1 if training else 0
    args = []
    if training:
        args.append(jnp.asarray([seed], dtype=jnp.int32))
    args += [x_pad, w1, b1, w2, b2, w3, b3]

    # "parallel" only pays off when there is actually >1 tile to shard.
    semantics = ("parallel",) if n_tiles > 1 else ("arbitrary",)

    out = pl.pallas_call(
        functools.partial(mlp_kernel, training=training),
        out_shape=jax.ShapeDtypeStruct((b_pad, OUT_PAD), out_dtype),
        grid_spec=pltpu.PrefetchScalarGridSpec(
            num_scalar_prefetch=num_prefetch,
            grid=(n_tiles,),
            in_specs=in_specs,
            out_specs=out_specs,
        ),
        compiler_params=pltpu.CompilerParams(
            dimension_semantics=semantics,
            vmem_limit_bytes=32 * 1024 * 1024,
        ),
        cost_estimate=cost,
    )(*args)

    return out[:B, :D_OUT]


def init_params(key):
    """Deterministic Kaiming-uniform-ish init matching torch Linear shapes."""
    ks = jax.random.split(key, 6)

    def linear(kw, kb, fan_in, fan_out):
        bound = 1.0 / jnp.sqrt(fan_in)
        # stored as (in, out) — transpose of torch's (out, in)
        w = jax.random.uniform(kw, (fan_in, fan_out), jnp.float32, -bound, bound)
        b = jax.random.uniform(kb, (1, fan_out), jnp.float32, -bound, bound)
        return w, b

    w1, b1 = linear(ks[0], ks[1], D_IN, H1)
    w2, b2 = linear(ks[2], ks[3], H1, H2)
    w3, b3 = linear(ks[4], ks[5], H2, D_OUT)
    return {"w1": w1, "b1": b1, "w2": w2, "b2": b2, "w3": w3, "b3": b3}


def pack_params(p, dtype=jnp.bfloat16, training=False):
    """Pad/cast logical params into the kernel layout.

    w1: (784,512) -> (896,512) (zero rows for the padded K lanes)
    w3: (128,10)  -> (128,128) (zero cols -> lane-dense output block)
    dtype defaults to bf16 on all TPU generations (MXU is bf16-native
    everywhere; accumulation stays f32); note bf16 also quantizes the
    inter-layer activations h1/h2 — fine for MNIST. Biases stay f32.
    With training=True the inverted-dropout scales 1/(1-p) are folded into
    w2 / w3 so the in-kernel dropout is a pure select.
    """
    s2 = 1.0 / (1.0 - P_DROP1) if training else 1.0
    s3 = 1.0 / (1.0 - P_DROP2) if training else 1.0
    w1 = jnp.zeros((K_PAD, H1), dtype).at[:D_IN, :].set(p["w1"].astype(dtype))
    w2 = (p["w2"] * s2).astype(dtype)
    w3 = jnp.zeros((H2, OUT_PAD), dtype).at[:, :D_OUT].set(
        (p["w3"] * s3).astype(dtype))
    b1 = p["b1"].astype(jnp.float32)
    b2 = p["b2"].astype(jnp.float32)
    b3 = jnp.zeros((1, OUT_PAD), jnp.float32).at[:, :D_OUT].set(
        p["b3"].astype(jnp.float32))
    return {"w1": w1, "b1": b1, "w2": w2, "b2": b2, "w3": w3, "b3": b3}


def reference_forward(x, p):
    h1 = jnp.maximum(x @ p["w1"] + p["b1"], 0.0)
    h2 = jnp.maximum(h1 @ p["w2"] + p["b2"], 0.0)
    return h2 @ p["w3"] + p["b3"]


if __name__ == "__main__":
    key = jax.random.PRNGKey(0)
    k_param, k_x = jax.random.split(key)
    params = init_params(k_param)

    batch = 16  # small demo batch -> one MXU-aligned tile, grid=(1,)
    x = jax.random.normal(k_x, (batch, D_IN), dtype=jnp.float32)

    ref = reference_forward(x, params)

    # 1) Eval mode (dropout = identity), f32 weights: exact check vs reference.
    packed_f32 = pack_params(params, jnp.float32)
    out = jax.block_until_ready(mnist_net_forward(x, packed_f32, training=False))
    assert out.shape == (batch, D_OUT)
    assert jnp.allclose(out, ref, atol=1e-4, rtol=1e-4), "f32 mismatch vs reference"

    # 2) Eval mode, default bf16 packing (all TPU generations) + bf16 output.
    packed_bf16 = pack_params(params)
    out_bf16 = jax.block_until_ready(
        mnist_net_forward(x, packed_bf16, training=False, out_dtype=jnp.bfloat16))
    assert out_bf16.shape == (batch, D_OUT)
    assert jnp.allclose(out_bf16.astype(jnp.float32), ref,
                        atol=5e-2, rtol=5e-2), "bf16 mismatch"

    # 3) Training mode: in-kernel dropout (p=0.3 / p=0.5) via counter-based
    #    hash PRNG; dropout scales folded into w2/w3 at pack time.
    packed_train = pack_params(params, jnp.float32, training=True)
    out_train = jax.block_until_ready(
        mnist_net_forward(x, packed_train, training=True, seed=1234))
    assert out_train.shape == (batch, D_OUT)
    assert bool(jnp.all(jnp.isfinite(out_train)))

    print("KERNEL_OK")
</pallas_src>

<mosaic_0001>
module attributes {stable_mosaic.version = 11 : i64} {
  func.func @mlp_kernel(%arg0: i32, %arg1: memref<16x896xf32, #tpu.memory_space<vmem>>, %arg2: memref<896x512xf32, #tpu.memory_space<vmem>>, %arg3: memref<1x512xf32, #tpu.memory_space<vmem>>, %arg4: memref<512x128xf32, #tpu.memory_space<vmem>>, %arg5: memref<1x128xf32, #tpu.memory_space<vmem>>, %arg6: memref<128x128xf32, #tpu.memory_space<vmem>>, %arg7: memref<1x128xf32, #tpu.memory_space<vmem>>, %arg8: memref<16x128xf32, #tpu.memory_space<vmem>>) attributes {dimension_semantics = [#tpu.dimension_semantics<arbitrary>], iteration_bounds = array<i64: 1>, scalar_prefetch = 0 : i64, scratch_operands = 0 : i64, tpu.core_type = #tpu.core_type<tc>, window_params = [{transform_indices = @transform_0, window_bounds = array<i64: 16, 896>}, {pipeline_mode = #tpu.pipeline_mode<synchronous>, transform_indices = @transform_1, window_bounds = array<i64: 896, 512>}, {pipeline_mode = #tpu.pipeline_mode<synchronous>, transform_indices = @transform_2, window_bounds = array<i64: 1, 512>}, {pipeline_mode = #tpu.pipeline_mode<synchronous>, transform_indices = @transform_3, window_bounds = array<i64: 512, 128>}, {pipeline_mode = #tpu.pipeline_mode<synchronous>, transform_indices = @transform_4, window_bounds = array<i64: 1, 128>}, {pipeline_mode = #tpu.pipeline_mode<synchronous>, transform_indices = @transform_5, window_bounds = array<i64: 128, 128>}, {pipeline_mode = #tpu.pipeline_mode<synchronous>, transform_indices = @transform_6, window_bounds = array<i64: 1, 128>}, {transform_indices = @transform_7, window_bounds = array<i64: 16, 128>}]} {
    %c0 = arith.constant 0 : index
    %c0_0 = arith.constant 0 : index
    %0 = vector.load %arg1[%c0, %c0_0] : memref<16x896xf32, #tpu.memory_space<vmem>>, vector<16x896xf32>
    %c0_1 = arith.constant 0 : index
    %c0_2 = arith.constant 0 : index
    %1 = vector.load %arg2[%c0_1, %c0_2] : memref<896x512xf32, #tpu.memory_space<vmem>>, vector<896x512xf32>
    %cst = arith.constant dense<0.000000e+00> : vector<16x512xf32>
    %2 = tpu.matmul %0, %1, %cst {dimension_numbers = #tpu.dot_dimension_numbers<[1], [0], [0], [1], [0, 0, 1, 1], [], []>} : vector<16x896xf32>, vector<896x512xf32>, vector<16x512xf32> -> vector<16x512xf32>
    %c0_3 = arith.constant 0 : index
    %c0_4 = arith.constant 0 : index
    %3 = vector.load %arg3[%c0_3, %c0_4] : memref<1x512xf32, #tpu.memory_space<vmem>>, vector<1x512xf32>
    %4 = vector.broadcast %3 : vector<1x512xf32> to vector<16x512xf32>
    %5 = arith.addf %2, %4 : vector<16x512xf32>
    %cst_5 = arith.constant 0.000000e+00 : f32
    %6 = vector.broadcast %cst_5 : f32 to vector<16x512xf32>
    %7 = arith.maximumf %5, %6 : vector<16x512xf32>
    %c0_6 = arith.constant 0 : index
    %c0_7 = arith.constant 0 : index
    %8 = vector.load %arg4[%c0_6, %c0_7] : memref<512x128xf32, #tpu.memory_space<vmem>>, vector<512x128xf32>
    %cst_8 = arith.constant dense<0.000000e+00> : vector<16x128xf32>
    %9 = tpu.matmul %7, %8, %cst_8 {dimension_numbers = #tpu.dot_dimension_numbers<[1], [0], [0], [1], [0, 0, 1, 1], [], []>} : vector<16x512xf32>, vector<512x128xf32>, vector<16x128xf32> -> vector<16x128xf32>
    %c0_9 = arith.constant 0 : index
    %c0_10 = arith.constant 0 : index
    %10 = vector.load %arg5[%c0_9, %c0_10] : memref<1x128xf32, #tpu.memory_space<vmem>>, vector<1x128xf32>
    %11 = vector.broadcast %10 : vector<1x128xf32> to vector<16x128xf32>
    %12 = arith.addf %9, %11 : vector<16x128xf32>
    %cst_11 = arith.constant 0.000000e+00 : f32
    %13 = vector.broadcast %cst_11 : f32 to vector<16x128xf32>
    %14 = arith.maximumf %12, %13 : vector<16x128xf32>
    %c0_12 = arith.constant 0 : index
    %c0_13 = arith.constant 0 : index
    %15 = vector.load %arg6[%c0_12, %c0_13] : memref<128x128xf32, #tpu.memory_space<vmem>>, vector<128x128xf32>
    %cst_14 = arith.constant dense<0.000000e+00> : vector<16x128xf32>
    %16 = tpu.matmul %14, %15, %cst_14 {dimension_numbers = #tpu.dot_dimension_numbers<[1], [0], [0], [1], [0, 0, 1, 1], [], []>} : vector<16x128xf32>, vector<128x128xf32>, vector<16x128xf32> -> vector<16x128xf32>
    %c0_15 = arith.constant 0 : index
    %c0_16 = arith.constant 0 : index
    %17 = vector.load %arg7[%c0_15, %c0_16] : memref<1x128xf32, #tpu.memory_space<vmem>>, vector<1x128xf32>
    %18 = vector.broadcast %17 : vector<1x128xf32> to vector<16x128xf32>
    %19 = arith.addf %16, %18 : vector<16x128xf32>
    %c0_17 = arith.constant 0 : index
    %c0_18 = arith.constant 0 : index
    %20 = vector.load %arg8[%c0_17, %c0_18] : memref<16x128xf32, #tpu.memory_space<vmem>>, vector<16x128xf32>
    tpu.vector_store %arg8[%c0_17, %c0_18], %19 {strides = array<i32>} : memref<16x128xf32, #tpu.memory_space<vmem>>, vector<16x128xf32>,
    return
  }
  func.func @transform_0(%arg0: i32) -> (i32, i32) {
    %c0_i32 = arith.constant 0 : i32
    %c0_i32_0 = arith.constant 0 : i32
    return %arg0, %c0_i32 : i32, i32
  }
  func.func @transform_1(%arg0: i32) -> (i32, i32) {
    %c0_i32 = arith.constant 0 : i32
    %c0_i32_0 = arith.constant 0 : i32
    %c0_i32_1 = arith.constant 0 : i32
    return %c0_i32, %c0_i32_0 : i32, i32
  }
  func.func @transform_2(%arg0: i32) -> (i32, i32) {
    %c0_i32 = arith.constant 0 : i32
    %c0_i32_0 = arith.constant 0 : i32
    %c0_i32_1 = arith.constant 0 : i32
    return %c0_i32, %c0_i32_0 : i32, i32
  }
  func.func @transform_3(%arg0: i32) -> (i32, i32) {
    %c0_i32 = arith.constant 0 : i32
    %c0_i32_0 = arith.constant 0 : i32
    %c0_i32_1 = arith.constant 0 : i32
    return %c0_i32, %c0_i32_0 : i32, i32
  }
  func.func @transform_4(%arg0: i32) -> (i32, i32) {
    %c0_i32 = arith.constant 0 : i32
    %c0_i32_0 = arith.constant 0 : i32
    %c0_i32_1 = arith.constant 0 : i32
    return %c0_i32, %c0_i32_0 : i32, i32
  }
  func.func @transform_5(%arg0: i32) -> (i32, i32) {
    %c0_i32 = arith.constant 0 : i32
    %c0_i32_0 = arith.constant 0 : i32
    %c0_i32_1 = arith.constant 0 : i32
    return %c0_i32, %c0_i32_0 : i32, i32
  }
  func.func @transform_6(%arg0: i32) -> (i32, i32) {
    %c0_i32 = arith.constant 0 : i32
    %c0_i32_0 = arith.constant 0 : i32
    %c0_i32_1 = arith.constant 0 : i32
    return %c0_i32, %c0_i32_0 : i32, i32
  }
  func.func @transform_7(%arg0: i32) -> (i32, i32) {
    %c0_i32 = arith.constant 0 : i32
    %c0_i32_0 = arith.constant 0 : i32
    return %arg0, %c0_i32 : i32, i32
  }
}

</mosaic_0001>

<llo_original>
// kernel: tpu_custom_call.1
$region0: #{tpu_custom_call.1}
  #allocation0 [shape = 'u32[]', space=smem, size = 0x4, offset = 0x4, fixed_abs, tag = 'smem constant byte address 0x4 - core index']
  #allocation1 [shape = 'u32[72,128]{1,0:T(1,128)}', space=vmem, size = 0x9000, scoped, tag = 'internal scratch']
  %s0 = inlined_call_operand.hbm [shape: f32[16,896], index: 0, kind: input, shape index: {}]
  %s1 = inlined_call_operand.hbm [shape: f32[896,512], index: 1, kind: input, shape index: {}]
  %s2 = inlined_call_operand.hbm [shape: f32[1,512], index: 2, kind: input, shape index: {}]
  %s3 = inlined_call_operand.hbm [shape: f32[512,128], index: 3, kind: input, shape index: {}]
  %s4 = inlined_call_operand.hbm [shape: f32[1,128], index: 4, kind: input, shape index: {}]
  %s5 = inlined_call_operand.hbm [shape: f32[128,128], index: 5, kind: input, shape index: {}]
  %s6 = inlined_call_operand.hbm [shape: f32[1,128], index: 6, kind: input, shape index: {}]
  %s7 = inlined_call_operand.hbm [shape: f32[16,128], index: 7, kind: output, shape index: {}]
  %s8 = sld [smem:[#allocation0]]
  $region66: #{tpu_custom_call.1} parent=0
    _
  %s10 = ssub.s32 1, %s8
  %s11 = scalar_select 0, %s10, %s8
  $region1: #{tpu_custom_call.1} parent=0
    #allocation2 [shape = 'u8[57344]{0}', space=vmem, size = 0xe000, scoped, tag = 'input window, operand 0, single buffered']
    #allocation3 [shape = 's32[1]{0}', space=sflag, size = 0x4, scoped, tag = 'scoped memory for tpu_custom_call.1']
    #allocation4 [shape = 's32[1]{0}', space=sflag, size = 0x4, scoped, tag = 'scoped memory for tpu_custom_call.1']
    #allocation5 [shape = 'u8[1835008]{0}', space=vmem, size = 0x1c0000, scoped, tag = 'input window, operand 1, single buffered']
    #allocation6 [shape = 's32[1]{0}', space=sflag, size = 0x4, scoped, tag = 'scoped memory for tpu_custom_call.1']
    #allocation7 [shape = 'u8[2048]{0}', space=vmem, size = 0x800, scoped, tag = 'input window, operand 2, single buffered']
    #allocation8 [shape = 'u8[262144]{0}', space=vmem, size = 0x40000, scoped, tag = 'input window, operand 3, single buffered']
    #allocation9 [shape = 's32[1]{0}', space=sflag, size = 0x4, scoped, tag = 'scoped memory for tpu_custom_call.1']
    #allocation10 [shape = 'u8[512]{0}', space=vmem, size = 0x400, scoped, tag = 'input window, operand 4, single buffered']
    #allocation11 [shape = 'u8[65536]{0}', space=vmem, size = 0x10000, scoped, tag = 'input window, operand 5, single buffered']
    #allocation12 [shape = 's32[1]{0}', space=sflag, size = 0x4, scoped, tag = 'scoped memory for tpu_custom_call.1']
    #allocation13 [shape = 'u8[512]{0}', space=vmem, size = 0x400, scoped, tag = 'input window, operand 6, single buffered']
    #allocation14 [shape = 'u8[8192]{0}', space=vmem, size = 0x2000, scoped, tag = 'output window, operand 0, single buffered']
    %12 = vsyncpa [#allocation3], 0
    %13 = vsyncpa [#allocation6], 0
    %14 = vsyncpa [#allocation9], 0
    %15 = vsyncpa [#allocation12], 0
    %16 = vsyncpa [#allocation4], 0
    // Predicated region
    $region2: #{tpu_custom_call.1} parent=1 // pred_check
      _
    $region3: #{tpu_custom_call.1} parent=1 // pred_check_branch
      %18 = sbr.rel (0) target = $region5
    $region4: #{tpu_custom_call.1} parent=1 // pred_region
      %20 = vsyncadd [#allocation3], 0
      %s21 = sshll.u32 %s0, 4
      %s22 = int_to_ptr.hbm [resolvable:$true] %s21
      %s23 = sshll.u32 [#allocation2], 4
      %s24 = int_to_ptr.vmem [resolvable:$true] %s23
      %29 = dma.hbm_to_vmem [thread:$0]  %s22, 1792, %s24, [#allocation3], 896, 896, 56
    $region5: #{tpu_custom_call.1} parent=1 // pred_fallthru
      _
    // Predicated region
    $region6: #{tpu_custom_call.1} parent=1 // pred_check
      _
    $region7: #{tpu_custom_call.1} parent=1 // pred_check_branch
      %31 = sbr.rel (0) target = $region9
    $region8: #{tpu_custom_call.1} parent=1 // pred_region
      %33 = vsyncadd [#allocation6], 0
      %s34 = sshll.u32 %s1, 4
      %s35 = int_to_ptr.hbm [resolvable:$true] %s34
      %s36 = sshll.u32 [#allocation5], 4
      %s37 = int_to_ptr.vmem [resolvable:$true] %s36
      %42 = dma.hbm_to_vmem [thread:$0]  %s35, 57344, %s37, [#allocation6], 512, 512, 32
    $region9: #{tpu_custom_call.1} parent=1 // pred_fallthru
      _
    // Predicated region
    $region10: #{tpu_custom_call.1} parent=1 // pred_check
      _
    $region11: #{tpu_custom_call.1} parent=1 // pred_check_branch
      %44 = sbr.rel (0) target = $region13
    $region12: #{tpu_custom_call.1} parent=1 // pred_region
      %46 = vsyncadd [#allocation6], 0
      %s48 = sshll.u32 %s2, 4
      %s49 = int_to_ptr.hbm [resolvable:$true] %s48
      %s50 = sshll.u32 [#allocation7], 4
      %s51 = int_to_ptr.vmem [resolvable:$true] %s50
      %53 = dma.hbm_to_vmem [thread:$0]  %s49, 64, %s51, [#allocation6]
    $region13: #{tpu_custom_call.1} parent=1 // pred_fallthru
      _
    // Predicated region
    $region14: #{tpu_custom_call.1} parent=1 // pred_check
      _
    $region15: #{tpu_custom_call.1} parent=1 // pred_check_branch
      %55 = sbr.rel (0) target = $region17
    $region16: #{tpu_custom_call.1} parent=1 // pred_region
      %57 = vsyncadd [#allocation9], 0
      %s58 = sshll.u32 %s3, 4
      %s59 = int_to_ptr.hbm [resolvable:$true] %s58
      %s60 = sshll.u32 [#allocation8], 4
      %s61 = int_to_ptr.vmem [resolvable:$true] %s60
      %66 = dma.hbm_to_vmem [thread:$0]  %s59, 8192, %s61, [#allocation9], 128, 128, 8
    $region17: #{tpu_custom_call.1} parent=1 // pred_fallthru
      _
    // Predicated region
    $region18: #{tpu_custom_call.1} parent=1 // pred_check
      _
    $region19: #{tpu_custom_call.1} parent=1 // pred_check_branch
      %68 = sbr.rel (0) target = $region21
    $region20: #{tpu_custom_call.1} parent=1 // pred_region
      %70 = vsyncadd [#allocation9], 0
      %s72 = sshll.u32 %s4, 4
      %s73 = int_to_ptr.hbm [resolvable:$true] %s72
      %s74 = sshll.u32 [#allocation10], 4
      %s75 = int_to_ptr.vmem [resolvable:$true] %s74
      %77 = dma.hbm_to_vmem [thread:$0]  %s73, 16, %s75, [#allocation9]
    $region21: #{tpu_custom_call.1} parent=1 // pred_fallthru
      _
    // Predicated region
    $region22: #{tpu_custom_call.1} parent=1 // pred_check
      _
    $region23: #{tpu_custom_call.1} parent=1 // pred_check_branch
      %79 = sbr.rel (0) target = $region25
    $region24: #{tpu_custom_call.1} parent=1 // pred_region
      %81 = vsyncadd [#allocation12], 0
      %s82 = sshll.u32 %s5, 4
      %s83 = int_to_ptr.hbm [resolvable:$true] %s82
      %s84 = sshll.u32 [#allocation11], 4
      %s85 = int_to_ptr.vmem [resolvable:$true] %s84
      %90 = dma.hbm_to_vmem [thread:$0]  %s83, 2048, %s85, [#allocation12], 128, 128, 8
    $region25: #{tpu_custom_call.1} parent=1 // pred_fallthru
      _
    // Predicated region
    $region26: #{tpu_custom_call.1} parent=1 // pred_check
      _
    $region27: #{tpu_custom_call.1} parent=1 // pred_check_branch
      %92 = sbr.rel (0) target = $region29
    $region28: #{tpu_custom_call.1} parent=1 // pred_region
      %94 = vsyncadd [#allocation12], 0
      %s96 = sshll.u32 %s6, 4
      %s97 = int_to_ptr.hbm [resolvable:$true] %s96
      %s98 = sshll.u32 [#allocation13], 4
      %s99 = int_to_ptr.vmem [resolvable:$true] %s98
      %101 = dma.hbm_to_vmem [thread:$0]  %s97, 16, %s99, [#allocation12]
    $region29: #{tpu_custom_call.1} parent=1 // pred_fallthru
      _
    // Predicated region
    $region30: #{tpu_custom_call.1} parent=1 // pred_check
      _
    $region31: #{tpu_custom_call.1} parent=1 // pred_check_branch
      %103 = sbr.rel (0) target = $region33
    $region32: #{tpu_custom_call.1} parent=1 // pred_region
      %105 = dma.done [#allocation3], 1792
    $region33: #{tpu_custom_call.1} parent=1 // pred_fallthru
      _
    // Predicated region
    $region34: #{tpu_custom_call.1} parent=1 // pred_check
      _
    $region35: #{tpu_custom_call.1} parent=1 // pred_check_branch
      %107 = sbr.rel (0) target = $region37
    $region36: #{tpu_custom_call.1} parent=1 // pred_region
      %109 = dma.done [#allocation6], 57344
    $region37: #{tpu_custom_call.1} parent=1 // pred_fallthru
      _
    // Predicated region
    $region38: #{tpu_custom_call.1} parent=1 // pred_check
      _
    $region39: #{tpu_custom_call.1} parent=1 // pred_check_branch
      %111 = sbr.rel (0) target = $region41
    $region40: #{tpu_custom_call.1} parent=1 // pred_region
      %113 = dma.done [#allocation6], 64
    $region41: #{tpu_custom_call.1} parent=1 // pred_fallthru
      _
    // Predicated region
    $region42: #{tpu_custom_call.1} parent=1 // pred_check
      _
    $region43: #{tpu_custom_call.1} parent=1 // pred_check_branch
      %115 = sbr.rel (0) target = $region45
    $region44: #{tpu_custom_call.1} parent=1 // pred_region
      %117 = dma.done [#allocation9], 8192
    $region45: #{tpu_custom_call.1} parent=1 // pred_fallthru
      _
    // Predicated region
    $region46: #{tpu_custom_call.1} parent=1 // pred_check
      _
    $region47: #{tpu_custom_call.1} parent=1 // pred_check_branch
      %119 = sbr.rel (0) target = $region49
    $region48: #{tpu_custom_call.1} parent=1 // pred_region
      %121 = dma.done [#allocation9], 16
    $region49: #{tpu_custom_call.1} parent=1 // pred_fallthru
      _
    // Predicated region
    $region50: #{tpu_custom_call.1} parent=1 // pred_check
      _
    $region51: #{tpu_custom_call.1} parent=1 // pred_check_branch
      %123 = sbr.rel (0) target = $region53
    $region52: #{tpu_custom_call.1} parent=1 // pred_region
      %125 = dma.done [#allocation12], 2048
    $region53: #{tpu_custom_call.1} parent=1 // pred_fallthru
      _
    // Predicated region
    $region54: #{tpu_custom_call.1} parent=1 // pred_check
      _
    $region55: #{tpu_custom_call.1} parent=1 // pred_check_branch
      %127 = sbr.rel (0) target = $region57
    $region56: #{tpu_custom_call.1} parent=1 // pred_region
      %129 = dma.done [#allocation12], 16
    $region57: #{tpu_custom_call.1} parent=1 // pred_fallthru
      _
    %v130 = vld [vmem:[#allocation2] sm:$0xff]
    %v131 = vld [vmem:[#allocation2 + $0x8] sm:$0xff]
    %v132 = vld [vmem:[#allocation2 + $0x10] sm:$0xff]
    %v133 = vld [vmem:[#allocation2 + $0x18] sm:$0xff]
    %v134 = vld [vmem:[#allocation2 + $0x20] sm:$0xff]
    %v135 = vld [vmem:[#allocation2 + $0x28] sm:$0xff]
    %v136 = vld [vmem:[#allocation2 + $0x30] sm:$0xff]
    %v137 = vld [vmem:[#allocation2 + $0x38] sm:$0xff]
    %v138 = vld [vmem:[#allocation2 + $0x40] sm:$0xff]
    %v139 = vld [vmem:[#allocation2 + $0x48] sm:$0xff]
    %v140 = vld [vmem:[#allocation2 + $0x50] sm:$0xff]
    %v141 = vld [vmem:[#allocation2 + $0x58] sm:$0xff]
    %v142 = vld [vmem:[#allocation2 + $0x60] sm:$0xff]
    %v143 = vld [vmem:[#allocation2 + $0x68] sm:$0xff]
    %v144 = vld [vmem:[#allocation5] sm:$0xff]
    %v145 = vld [vmem:[#allocation5 + $0x8] sm:$0xff]
    %v146 = vld [vmem:[#allocation5 + $0x10] sm:$0xff]
    %v147 = vld [vmem:[#allocation5 + $0x18] sm:$0xff]
    %v148 = vld [vmem:[#allocation5 + $0x20] sm:$0xff]
    %v149 = vld [vmem:[#allocation5 + $0x28] sm:$0xff]
    %v150 = vld [vmem:[#allocation5 + $0x30] sm:$0xff]
    %v151 = vld [vmem:[#allocation5 + $0x38] sm:$0xff]
    %v152 = vld [vmem:[#allocation5 + $0x40] sm:$0xff]
    %v153 = vld [vmem:[#allocation5 + $0x48] sm:$0xff]
    %v154 = vld [vmem:[#allocation5 + $0x50] sm:$0xff]
    %v155 = vld [vmem:[#allocation5 + $0x58] sm:$0xff]
    %v156 = vld [vmem:[#allocation5 + $0x60] sm:$0xff]
    %v157 = vld [vmem:[#allocation5 + $0x68] sm:$0xff]
    %v158 = vld [vmem:[#allocation5 + $0x70] sm:$0xff]
    %v159 = vld [vmem:[#allocation5 + $0x78] sm:$0xff]
    %v160 = vld [vmem:[#allocation5 + $0x80] sm:$0xff]
    %v161 = vld [vmem:[#allocation5 + $0x88] sm:$0xff]
    %v162 = vld [vmem:[#allocation5 + $0x90] sm:$0xff]
    %v163 = vld [vmem:[#allocation5 + $0x98] sm:$0xff]
    %v164 = vld [vmem:[#allocation5 + $0xa0] sm:$0xff]
    %v165 = vld [vmem:[#allocation5 + $0xa8] sm:$0xff]
    %v166 = vld [vmem:[#allocation5 + $0xb0] sm:$0xff]
    %v167 = vld [vmem:[#allocation5 + $0xb8] sm:$0xff]
    %v168 = vld [vmem:[#allocation5 + $0xc0] sm:$0xff]
    %v169 = vld [vmem:[#allocation5 + $0xc8] sm:$0xff]
    %v170 = vld [vmem:[#allocation5 + $0xd0] sm:$0xff]
    %v171 = vld [vmem:[#allocation5 + $0xd8] sm:$0xff]
    %v172 = vld [vmem:[#allocation5 + $0xe0] sm:$0xff]
    %v173 = vld [vmem:[#allocation5 + $0xe8] sm:$0xff]
    %v174 = vld [vmem:[#allocation5 + $0xf0] sm:$0xff]
    %v175 = vld [vmem:[#allocation5 + $0xf8] sm:$0xff]
    %v176 = vld [vmem:[#allocation5 + $0x100] sm:$0xff]
    %v177 = vld [vmem:[#allocation5 + $0x108] sm:$0xff]
    %v178 = vld [vmem:[#allocation5 + $0x110] sm:$0xff]
    %v179 = vld [vmem:[#allocation5 + $0x118] sm:$0xff]
    %v180 = vld [vmem:[#allocation5 + $0x120] sm:$0xff]
    %v181 = vld [vmem:[#allocation5 + $0x128] sm:$0xff]
    %v182 = vld [vmem:[#allocation5 + $0x130] sm:$0xff]
    %v183 = vld [vmem:[#allocation5 + $0x138] sm:$0xff]
    %v184 = vld [vmem:[#allocation5 + $0x140] sm:$0xff]
    %v185 = vld [vmem:[#allocation5 + $0x148] sm:$0xff]
    %v186 = vld [vmem:[#allocation5 + $0x150] sm:$0xff]
    %v187 = vld [vmem:[#allocation5 + $0x158] sm:$0xff]
    %v188 = vld [vmem:[#allocation5 + $0x160] sm:$0xff]
    %v189 = vld [vmem:[#allocation5 + $0x168] sm:$0xff]
    %v190 = vld [vmem:[#allocation5 + $0x170] sm:$0xff]
    %v191 = vld [vmem:[#allocation5 + $0x178] sm:$0xff]
    %v192 = vld [vmem:[#allocation5 + $0x180] sm:$0xff]
    %v193 = vld [vmem:[#allocation5 + $0x188] sm:$0xff]
    %v194 = vld [vmem:[#allocation5 + $0x190] sm:$0xff]
    %v195 = vld [vmem:[#allocation5 + $0x198] sm:$0xff]
    %v196 = vld [vmem:[#allocation5 + $0x1a0] sm:$0xff]
    %v197 = vld [vmem:[#allocation5 + $0x1a8] sm:$0xff]
    %v198 = vld [vmem:[#allocation5 + $0x1b0] sm:$0xff]
    %v199 = vld [vmem:[#allocation5 + $0x1b8] sm:$0xff]
    %v200 = vld [vmem:[#allocation5 + $0x1c0] sm:$0xff]
    %v201 = vld [vmem:[#allocation5 + $0x1c8] sm:$0xff]
    %v202 = vld [vmem:[#allocation5 + $0x1d0] sm:$0xff]
    %v203 = vld [vmem:[#allocation5 + $0x1d8] sm:$0xff]
    %v204 = vld [vmem:[#allocation5 + $0x1e0] sm:$0xff]
    %v205 = vld [vmem:[#allocation5 + $0x1e8] sm:$0xff]
    %v206 = vld [vmem:[#allocation5 + $0x1f0] sm:$0xff]
    %v207 = vld [vmem:[#allocation5 + $0x1f8] sm:$0xff]
    %v208 = vld [vmem:[#allocation5 + $0x200] sm:$0xff]
    %v209 = vld [vmem:[#allocation5 + $0x208] sm:$0xff]
    %v210 = vld [vmem:[#allocation5 + $0x210] sm:$0xff]
    %v211 = vld [vmem:[#allocation5 + $0x218] sm:$0xff]
    %v212 = vld [vmem:[#allocation5 + $0x220] sm:$0xff]
    %v213 = vld [vmem:[#allocation5 + $0x228] sm:$0xff]
    %v214 = vld [vmem:[#allocation5 + $0x230] sm:$0xff]
    %v215 = vld [vmem:[#allocation5 + $0x238] sm:$0xff]
    %v216 = vld [vmem:[#allocation5 + $0x240] sm:$0xff]
    %v217 = vld [vmem:[#allocation5 + $0x248] sm:$0xff]
    %v218 = vld [vmem:[#allocation5 + $0x250] sm:$0xff]
    %v219 = vld [vmem:[#allocation5 + $0x258] sm:$0xff]
    %v220 = vld [vmem:[#allocation5 + $0x260] sm:$0xff]
    %v221 = vld [vmem:[#allocation5 + $0x268] sm:$0xff]
    %v222 = vld [vmem:[#allocation5 + $0x270] sm:$0xff]
    %v223 = vld [vmem:[#allocation5 + $0x278] sm:$0xff]
    %v224 = vld [vmem:[#allocation5 + $0x280] sm:$0xff]
    %v225 = vld [vmem:[#allocation5 + $0x288] sm:$0xff]
    %v226 = vld [vmem:[#allocation5 + $0x290] sm:$0xff]
    %v227 = vld [vmem:[#allocation5 + $0x298] sm:$0xff]
    %v228 = vld [vmem:[#allocation5 + $0x2a0] sm:$0xff]
    %v229 = vld [vmem:[#allocation5 + $0x2a8] sm:$0xff]
    %v230 = vld [vmem:[#allocation5 + $0x2b0] sm:$0xff]
    %v231 = vld [vmem:[#allocation5 + $0x2b8] sm:$0xff]
    %v232 = vld [vmem:[#allocation5 + $0x2c0] sm:$0xff]
    %v233 = vld [vmem:[#allocation5 + $0x2c8] sm:$0xff]
    %v234 = vld [vmem:[#allocation5 + $0x2d0] sm:$0xff]
    %v235 = vld [vmem:[#allocation5 + $0x2d8] sm:$0xff]
    %v236 = vld [vmem:[#allocation5 + $0x2e0] sm:$0xff]
    %v237 = vld [vmem:[#allocation5 + $0x2e8] sm:$0xff]
    %v238 = vld [vmem:[#allocation5 + $0x2f0] sm:$0xff]
    %v239 = vld [vmem:[#allocation5 + $0x2f8] sm:$0xff]
    %v240 = vld [vmem:[#allocation5 + $0x300] sm:$0xff]
    %v241 = vld [vmem:[#allocation5 + $0x308] sm:$0xff]
    %v242 = vld [vmem:[#allocation5 + $0x310] sm:$0xff]
    %v243 = vld [vmem:[#allocation5 + $0x318] sm:$0xff]
    %v244 = vld [vmem:[#allocation5 + $0x320] sm:$0xff]
    %v245 = vld [vmem:[#allocation5 + $0x328] sm:$0xff]
    %v246 = vld [vmem:[#allocation5 + $0x330] sm:$0xff]
    %v247 = vld [vmem:[#allocation5 + $0x338] sm:$0xff]
    %v248 = vld [vmem:[#allocation5 + $0x340] sm:$0xff]
    %v249 = vld [vmem:[#allocation5 + $0x348] sm:$0xff]
    %v250 = vld [vmem:[#allocation5 + $0x350] sm:$0xff]
    %v251 = vld [vmem:[#allocation5 + $0x358] sm:$0xff]
    %v252 = vld [vmem:[#allocation5 + $0x360] sm:$0xff]
    %v253 = vld [vmem:[#allocation5 + $0x368] sm:$0xff]
    %v254 = vld [vmem:[#allocation5 + $0x370] sm:$0xff]
    %v255 = vld [vmem:[#allocation5 + $0x378] sm:$0xff]
    %v256 = vld [vmem:[#allocation5 + $0x380] sm:$0xff]
    %v257 = vld [vmem:[#allocation5 + $0x388] sm:$0xff]
    %v258 = vld [vmem:[#allocation5 + $0x390] sm:$0xff]
    %v259 = vld [vmem:[#allocation5 + $0x398] sm:$0xff]
    %v260 = vld [vmem:[#allocation5 + $0x3a0] sm:$0xff]
    %v261 = vld [vmem:[#allocation5 + $0x3a8] sm:$0xff]
    %v262 = vld [vmem:[#allocation5 + $0x3b0] sm:$0xff]
    %v263 = vld [vmem:[#allocation5 + $0x3b8] sm:$0xff]
    %v264 = vld [vmem:[#allocation5 + $0x3c0] sm:$0xff]
    %v265 = vld [vmem:[#allocation5 + $0x3c8] sm:$0xff]
    %v266 = vld [vmem:[#allocation5 + $0x3d0] sm:$0xff]
    %v267 = vld [vmem:[#allocation5 + $0x3d8] sm:$0xff]
    %v268 = vld [vmem:[#allocation5 + $0x3e0] sm:$0xff]
    %v269 = vld [vmem:[#allocation5 + $0x3e8] sm:$0xff]
    %v270 = vld [vmem:[#allocation5 + $0x3f0] sm:$0xff]
    %v271 = vld [vmem:[#allocation5 + $0x3f8] sm:$0xff]
    %v272 = vld [vmem:[#allocation5 + $0x400] sm:$0xff]
    %v273 = vld [vmem:[#allocation5 + $0x408] sm:$0xff]
    %v274 = vld [vmem:[#allocation5 + $0x410] sm:$0xff]
    %v275 = vld [vmem:[#allocation5 + $0x418] sm:$0xff]
    %v276 = vld [vmem:[#allocation5 + $0x420] sm:$0xff]
    %v277 = vld [vmem:[#allocation5 + $0x428] sm:$0xff]
    %v278 = vld [vmem:[#allocation5 + $0x430] sm:$0xff]
    %v279 = vld [vmem:[#allocation5 + $0x438] sm:$0xff]
    %v280 = vld [vmem:[#allocation5 + $0x440] sm:$0xff]
    %v281 = vld [vmem:[#allocation5 + $0x448] sm:$0xff]
    %v282 = vld [vmem:[#allocation5 + $0x450] sm:$0xff]
    %v283 = vld [vmem:[#allocation5 + $0x458] sm:$0xff]
    %v284 = vld [vmem:[#allocation5 + $0x460] sm:$0xff]
    %v285 = vld [vmem:[#allocation5 + $0x468] sm:$0xff]
    %v286 = vld [vmem:[#allocation5 + $0x470] sm:$0xff]
    %v287 = vld [vmem:[#allocation5 + $0x478] sm:$0xff]
    %v288 = vld [vmem:[#allocation5 + $0x480] sm:$0xff]
    %v289 = vld [vmem:[#allocation5 + $0x488] sm:$0xff]
    %v290 = vld [vmem:[#allocation5 + $0x490] sm:$0xff]
    %v291 = vld [vmem:[#allocation5 + $0x498] sm:$0xff]
    %v292 = vld [vmem:[#allocation5 + $0x4a0] sm:$0xff]
    %v293 = vld [vmem:[#allocation5 + $0x4a8] sm:$0xff]
    %v294 = vld [vmem:[#allocation5 + $0x4b0] sm:$0xff]
    %v295 = vld [vmem:[#allocation5 + $0x4b8] sm:$0xff]
    %v296 = vld [vmem:[#allocation5 + $0x4c0] sm:$0xff]
    %v297 = vld [vmem:[#allocation5 + $0x4c8] sm:$0xff]
    %v298 = vld [vmem:[#allocation5 + $0x4d0] sm:$0xff]
    %v299 = vld [vmem:[#allocation5 + $0x4d8] sm:$0xff]
    %v300 = vld [vmem:[#allocation5 + $0x4e0] sm:$0xff]
    %v301 = vld [vmem:[#allocation5 + $0x4e8] sm:$0xff]
    %v302 = vld [vmem:[#allocation5 + $0x4f0] sm:$0xff]
    %v303 = vld [vmem:[#allocation5 + $0x4f8] sm:$0xff]
    %v304 = vld [vmem:[#allocation5 + $0x500] sm:$0xff]
    %v305 = vld [vmem:[#allocation5 + $0x508] sm:$0xff]
    %v306 = vld [vmem:[#allocation5 + $0x510] sm:$0xff]
    %v307 = vld [vmem:[#allocation5 + $0x518] sm:$0xff]
    %v308 = vld [vmem:[#allocation5 + $0x520] sm:$0xff]
    %v309 = vld [vmem:[#allocation5 + $0x528] sm:$0xff]
    %v310 = vld [vmem:[#allocation5 + $0x530] sm:$0xff]
    %v311 = vld [vmem:[#allocation5 + $0x538] sm:$0xff]
    %v312 = vld [vmem:[#allocation5 + $0x540] sm:$0xff]
    %v313 = vld [vmem:[#allocation5 + $0x548] sm:$0xff]
    %v314 = vld [vmem:[#allocation5 + $0x550] sm:$0xff]
    %v315 = vld [vmem:[#allocation5 + $0x558] sm:$0xff]
    %v316 = vld [vmem:[#allocation5 + $0x560] sm:$0xff]
    %v317 = vld [vmem:[#allocation5 + $0x568] sm:$0xff]
    %v318 = vld [vmem:[#allocation5 + $0x570] sm:$0xff]
    %v319 = vld [vmem:[#allocation5 + $0x578] sm:$0xff]
    %v320 = vld [vmem:[#allocation5 + $0x580] sm:$0xff]
    %v321 = vld [vmem:[#allocation5 + $0x588] sm:$0xff]
    %v322 = vld [vmem:[#allocation5 + $0x590] sm:$0xff]
    %v323 = vld [vmem:[#allocation5 + $0x598] sm:$0xff]
    %v324 = vld [vmem:[#allocation5 + $0x5a0] sm:$0xff]
    %v325 = vld [vmem:[#allocation5 + $0x5a8] sm:$0xff]
    %v326 = vld [vmem:[#allocation5 + $0x5b0] sm:$0xff]
    %v327 = vld [vmem:[#allocation5 + $0x5b8] sm:$0xff]
    %v328 = vld [vmem:[#allocation5 + $0x5c0] sm:$0xff]
    %v329 = vld [vmem:[#allocation5 + $0x5c8] sm:$0xff]
    %v330 = vld [vmem:[#allocation5 + $0x5d0] sm:$0xff]
    %v331 = vld [vmem:[#allocation5 + $0x5d8] sm:$0xff]
    %v332 = vld [vmem:[#allocation5 + $0x5e0] sm:$0xff]
    %v333 = vld [vmem:[#allocation5 + $0x5e8] sm:$0xff]
    %v334 = vld [vmem:[#allocation5 + $0x5f0] sm:$0xff]
    %v335 = vld [vmem:[#allocation5 + $0x5f8] sm:$0xff]
    %v336 = vld [vmem:[#allocation5 + $0x600] sm:$0xff]
    %v337 = vld [vmem:[#allocation5 + $0x608] sm:$0xff]
    %v338 = vld [vmem:[#allocation5 + $0x610] sm:$0xff]
    %v339 = vld [vmem:[#allocation5 + $0x618] sm:$0xff]
    %v340 = vld [vmem:[#allocation5 + $0x620] sm:$0xff]
    %v341 = vld [vmem:[#allocation5 + $0x628] sm:$0xff]
    %v342 = vld [vmem:[#allocation5 + $0x630] sm:$0xff]
    %v343 = vld [vmem:[#allocation5 + $0x638] sm:$0xff]
    %v344 = vld [vmem:[#allocation5 + $0x640] sm:$0xff]
    %v345 = vld [vmem:[#allocation5 + $0x648] sm:$0xff]
    %v346 = vld [vmem:[#allocation5 + $0x650] sm:$0xff]
    %v347 = vld [vmem:[#allocation5 + $0x658] sm:$0xff]
    %v348 = vld [vmem:[#allocation5 + $0x660] sm:$0xff]
    %v349 = vld [vmem:[#allocation5 + $0x668] sm:$0xff]
    %v350 = vld [vmem:[#allocation5 + $0x670] sm:$0xff]
    %v351 = vld [vmem:[#allocation5 + $0x678] sm:$0xff]
    %v352 = vld [vmem:[#allocation5 + $0x680] sm:$0xff]
    %v353 = vld [vmem:[#allocation5 + $0x688] sm:$0xff]
    %v354 = vld [vmem:[#allocation5 + $0x690] sm:$0xff]
    %v355 = vld [vmem:[#allocation5 + $0x698] sm:$0xff]
    %v356 = vld [vmem:[#allocation5 + $0x6a0] sm:$0xff]
    %v357 = vld [vmem:[#allocation5 + $0x6a8] sm:$0xff]
    %v358 = vld [vmem:[#allocation5 + $0x6b0] sm:$0xff]
    %v359 = vld [vmem:[#allocation5 + $0x6b8] sm:$0xff]
    %v360 = vld [vmem:[#allocation5 + $0x6c0] sm:$0xff]
    %v361 = vld [vmem:[#allocation5 + $0x6c8] sm:$0xff]
    %v362 = vld [vmem:[#allocation5 + $0x6d0] sm:$0xff]
    %v363 = vld [vmem:[#allocation5 + $0x6d8] sm:$0xff]
    %v364 = vld [vmem:[#allocation5 + $0x6e0] sm:$0xff]
    %v365 = vld [vmem:[#allocation5 + $0x6e8] sm:$0xff]
    %v366 = vld [vmem:[#allocation5 + $0x6f0] sm:$0xff]
    %v367 = vld [vmem:[#allocation5 + $0x6f8] sm:$0xff]
    %v368 = vld [vmem:[#allocation5 + $0x700] sm:$0xff]
    %v369 = vld [vmem:[#allocation5 + $0x708] sm:$0xff]
    %v370 = vld [vmem:[#allocation5 + $0x710] sm:$0xff]
    %v371 = vld [vmem:[#allocation5 + $0x718] sm:$0xff]
    %v372 = vld [vmem:[#allocation5 + $0x720] sm:$0xff]
    %v373 = vld [vmem:[#allocation5 + $0x728] sm:$0xff]
    %v374 = vld [vmem:[#allocation5 + $0x730] sm:$0xff]
    %v375 = vld [vmem:[#allocation5 + $0x738] sm:$0xff]
    %v376 = vld [vmem:[#allocation5 + $0x740] sm:$0xff]
    %v377 = vld [vmem:[#allocation5 + $0x748] sm:$0xff]
    %v378 = vld [vmem:[#allocation5 + $0x750] sm:$0xff]
    %v379 = vld [vmem:[#allocation5 + $0x758] sm:$0xff]
    %v380 = vld [vmem:[#allocation5 + $0x760] sm:$0xff]
    %v381 = vld [vmem:[#allocation5 + $0x768] sm:$0xff]
    %v382 = vld [vmem:[#allocation5 + $0x770] sm:$0xff]
    %v383 = vld [vmem:[#allocation5 + $0x778] sm:$0xff]
    %v384 = vld [vmem:[#allocation5 + $0x780] sm:$0xff]
    %v385 = vld [vmem:[#allocation5 + $0x788] sm:$0xff]
    %v386 = vld [vmem:[#allocation5 + $0x790] sm:$0xff]
    %v387 = vld [vmem:[#allocation5 + $0x798] sm:$0xff]
    %v388 = vld [vmem:[#allocation5 + $0x7a0] sm:$0xff]
    %v389 = vld [vmem:[#allocation5 + $0x7a8] sm:$0xff]
    %v390 = vld [vmem:[#allocation5 + $0x7b0] sm:$0xff]
    %v391 = vld [vmem:[#allocation5 + $0x7b8] sm:$0xff]
    %v392 = vld [vmem:[#allocation5 + $0x7c0] sm:$0xff]
    %v393 = vld [vmem:[#allocation5 + $0x7c8] sm:$0xff]
    %v394 = vld [vmem:[#allocation5 + $0x7d0] sm:$0xff]
    %v395 = vld [vmem:[#allocation5 + $0x7d8] sm:$0xff]
    %v396 = vld [vmem:[#allocation5 + $0x7e0] sm:$0xff]
    %v397 = vld [vmem:[#allocation5 + $0x7e8] sm:$0xff]
    %v398 = vld [vmem:[#allocation5 + $0x7f0] sm:$0xff]
    %v399 = vld [vmem:[#allocation5 + $0x7f8] sm:$0xff]
    %v400 = vld [vmem:[#allocation5 + $0x800] sm:$0xff]
    %v401 = vld [vmem:[#allocation5 + $0x808] sm:$0xff]
    %v402 = vld [vmem:[#allocation5 + $0x810] sm:$0xff]
    %v403 = vld [vmem:[#allocation5 + $0x818] sm:$0xff]
    %v404 = vld [vmem:[#allocation5 + $0x820] sm:$0xff]
    %v405 = vld [vmem:[#allocation5 + $0x828] sm:$0xff]
    %v406 = vld [vmem:[#allocation5 + $0x830] sm:$0xff]
    %v407 = vld [vmem:[#allocation5 + $0x838] sm:$0xff]
    %v408 = vld [vmem:[#allocation5 + $0x840] sm:$0xff]
    %v409 = vld [vmem:[#allocation5 + $0x848] sm:$0xff]
    %v410 = vld [vmem:[#allocation5 + $0x850] sm:$0xff]
    %v411 = vld [vmem:[#allocation5 + $0x858] sm:$0xff]
    %v412 = vld [vmem:[#allocation5 + $0x860] sm:$0xff]
    %v413 = vld [vmem:[#allocation5 + $0x868] sm:$0xff]
    %v414 = vld [vmem:[#allocation5 + $0x870] sm:$0xff]
    %v415 = vld [vmem:[#allocation5 + $0x878] sm:$0xff]
    %v416 = vld [vmem:[#allocation5 + $0x880] sm:$0xff]
    %v417 = vld [vmem:[#allocation5 + $0x888] sm:$0xff]
    %v418 = vld [vmem:[#allocation5 + $0x890] sm:$0xff]
    %v419 = vld [vmem:[#allocation5 + $0x898] sm:$0xff]
    %v420 = vld [vmem:[#allocation5 + $0x8a0] sm:$0xff]
    %v421 = vld [vmem:[#allocation5 + $0x8a8] sm:$0xff]
    %v422 = vld [vmem:[#allocation5 + $0x8b0] sm:$0xff]
    %v423 = vld [vmem:[#allocation5 + $0x8b8] sm:$0xff]
    %v424 = vld [vmem:[#allocation5 + $0x8c0] sm:$0xff]
    %v425 = vld [vmem:[#allocation5 + $0x8c8] sm:$0xff]
    %v426 = vld [vmem:[#allocation5 + $0x8d0] sm:$0xff]
    %v427 = vld [vmem:[#allocation5 + $0x8d8] sm:$0xff]
    %v428 = vld [vmem:[#allocation5 + $0x8e0] sm:$0xff]
    %v429 = vld [vmem:[#allocation5 + $0x8e8] sm:$0xff]
    %v430 = vld [vmem:[#allocation5 + $0x8f0] sm:$0xff]
    %v431 = vld [vmem:[#allocation5 + $0x8f8] sm:$0xff]
    %v432 = vld [vmem:[#allocation5 + $0x900] sm:$0xff]
    %v433 = vld [vmem:[#allocation5 + $0x908] sm:$0xff]
    %v434 = vld [vmem:[#allocation5 + $0x910] sm:$0xff]
    %v435 = vld [vmem:[#allocation5 + $0x918] sm:$0xff]
    %v436 = vld [vmem:[#allocation5 + $0x920] sm:$0xff]
    %v437 = vld [vmem:[#allocation5 + $0x928] sm:$0xff]
    %v438 = vld [vmem:[#allocation5 + $0x930] sm:$0xff]
    %v439 = vld [vmem:[#allocation5 + $0x938] sm:$0xff]
    %v440 = vld [vmem:[#allocation5 + $0x940] sm:$0xff]
    %v441 = vld [vmem:[#allocation5 + $0x948] sm:$0xff]
    %v442 = vld [vmem:[#allocation5 + $0x950] sm:$0xff]
    %v443 = vld [vmem:[#allocation5 + $0x958] sm:$0xff]
    %v444 = vld [vmem:[#allocation5 + $0x960] sm:$0xff]
    %v445 = vld [vmem:[#allocation5 + $0x968] sm:$0xff]
    %v446 = vld [vmem:[#allocation5 + $0x970] sm:$0xff]
    %v447 = vld [vmem:[#allocation5 + $0x978] sm:$0xff]
    %v448 = vld [vmem:[#allocation5 + $0x980] sm:$0xff]
    %v449 = vld [vmem:[#allocation5 + $0x988] sm:$0xff]
    %v450 = vld [vmem:[#allocation5 + $0x990] sm:$0xff]
    %v451 = vld [vmem:[#allocation5 + $0x998] sm:$0xff]
    %v452 = vld [vmem:[#allocation5 + $0x9a0] sm:$0xff]
    %v453 = vld [vmem:[#allocation5 + $0x9a8] sm:$0xff]
    %v454 = vld [vmem:[#allocation5 + $0x9b0] sm:$0xff]
    %v455 = vld [vmem:[#allocation5 + $0x9b8] sm:$0xff]
    %v456 = vld [vmem:[#allocation5 + $0x9c0] sm:$0xff]
    %v457 = vld [vmem:[#allocation5 + $0x9c8] sm:$0xff]
    %v458 = vld [vmem:[#allocation5 + $0x9d0] sm:$0xff]
    %v459 = vld [vmem:[#allocation5 + $0x9d8] sm:$0xff]
    %v460 = vld [vmem:[#allocation5 + $0x9e0] sm:$0xff]
    %v461 = vld [vmem:[#allocation5 + $0x9e8] sm:$0xff]
    %v462 = vld [vmem:[#allocation5 + $0x9f0] sm:$0xff]
    %v463 = vld [vmem:[#allocation5 + $0x9f8] sm:$0xff]
    %v464 = vld [vmem:[#allocation5 + $0xa00] sm:$0xff]
    %v465 = vld [vmem:[#allocation5 + $0xa08] sm:$0xff]
    %v466 = vld [vmem:[#allocation5 + $0xa10] sm:$0xff]
    %v467 = vld [vmem:[#allocation5 + $0xa18] sm:$0xff]
    %v468 = vld [vmem:[#allocation5 + $0xa20] sm:$0xff]
    %v469 = vld [vmem:[#allocation5 + $0xa28] sm:$0xff]
    %v470 = vld [vmem:[#allocation5 + $0xa30] sm:$0xff]
    %v471 = vld [vmem:[#allocation5 + $0xa38] sm:$0xff]
    %v472 = vld [vmem:[#allocation5 + $0xa40] sm:$0xff]
    %v473 = vld [vmem:[#allocation5 + $0xa48] sm:$0xff]
    %v474 = vld [vmem:[#allocation5 + $0xa50] sm:$0xff]
    %v475 = vld [vmem:[#allocation5 + $0xa58] sm:$0xff]
    %v476 = vld [vmem:[#allocation5 + $0xa60] sm:$0xff]
    %v477 = vld [vmem:[#allocation5 + $0xa68] sm:$0xff]
    %v478 = vld [vmem:[#allocation5 + $0xa70] sm:$0xff]
    %v479 = vld [vmem:[#allocation5 + $0xa78] sm:$0xff]
    %v480 = vld [vmem:[#allocation5 + $0xa80] sm:$0xff]
    %v481 = vld [vmem:[#allocation5 + $0xa88] sm:$0xff]
    %v482 = vld [vmem:[#allocation5 + $0xa90] sm:$0xff]
    %v483 = vld [vmem:[#allocation5 + $0xa98] sm:$0xff]
    %v484 = vld [vmem:[#allocation5 + $0xaa0] sm:$0xff]
    %v485 = vld [vmem:[#allocation5 + $0xaa8] sm:$0xff]
    %v486 = vld [vmem:[#allocation5 + $0xab0] sm:$0xff]
    %v487 = vld [vmem:[#allocation5 + $0xab8] sm:$0xff]
    %v488 = vld [vmem:[#allocation5 + $0xac0] sm:$0xff]
    %v489 = vld [vmem:[#allocation5 + $0xac8] sm:$0xff]
    %v490 = vld [vmem:[#allocation5 + $0xad0] sm:$0xff]
    %v491 = vld [vmem:[#allocation5 + $0xad8] sm:$0xff]
    %v492 = vld [vmem:[#allocation5 + $0xae0] sm:$0xff]
    %v493 = vld [vmem:[#allocation5 + $0xae8] sm:$0xff]
    %v494 = vld [vmem:[#allocation5 + $0xaf0] sm:$0xff]
    %v495 = vld [vmem:[#allocation5 + $0xaf8] sm:$0xff]
    %v496 = vld [vmem:[#allocation5 + $0xb00] sm:$0xff]
    %v497 = vld [vmem:[#allocation5 + $0xb08] sm:$0xff]
    %v498 = vld [vmem:[#allocation5 + $0xb10] sm:$0xff]
    %v499 = vld [vmem:[#allocation5 + $0xb18] sm:$0xff]
    %v500 = vld [vmem:[#allocation5 + $0xb20] sm:$0xff]
    %v501 = vld [vmem:[#allocation5 + $0xb28] sm:$0xff]
    %v502 = vld [vmem:[#allocation5 + $0xb30] sm:$0xff]
    %v503 = vld [vmem:[#allocation5 + $0xb38] sm:$0xff]
    %v504 = vld [vmem:[#allocation5 + $0xb40] sm:$0xff]
    %v505 = vld [vmem:[#allocation5 + $0xb48] sm:$0xff]
    %v506 = vld [vmem:[#allocation5 + $0xb50] sm:$0xff]
    %v507 = vld [vmem:[#allocation5 + $0xb58] sm:$0xff]
    %v508 = vld [vmem:[#allocation5 + $0xb60] sm:$0xff]
    %v509 = vld [vmem:[#allocation5 + $0xb68] sm:$0xff]
    %v510 = vld [vmem:[#allocation5 + $0xb70] sm:$0xff]
    %v511 = vld [vmem:[#allocation5 + $0xb78] sm:$0xff]
    %v512 = vld [vmem:[#allocation5 + $0xb80] sm:$0xff]
    %v513 = vld [vmem:[#allocation5 + $0xb88] sm:$0xff]
    %v514 = vld [vmem:[#allocation5 + $0xb90] sm:$0xff]
    %v515 = vld [vmem:[#allocation5 + $0xb98] sm:$0xff]
    %v516 = vld [vmem:[#allocation5 + $0xba0] sm:$0xff]
    %v517 = vld [vmem:[#allocation5 + $0xba8] sm:$0xff]
    %v518 = vld [vmem:[#allocation5 + $0xbb0] sm:$0xff]
    %v519 = vld [vmem:[#allocation5 + $0xbb8] sm:$0xff]
    %v520 = vld [vmem:[#allocation5 + $0xbc0] sm:$0xff]
    %v521 = vld [vmem:[#allocation5 + $0xbc8] sm:$0xff]
    %v522 = vld [vmem:[#allocation5 + $0xbd0] sm:$0xff]
    %v523 = vld [vmem:[#allocation5 + $0xbd8] sm:$0xff]
    %v524 = vld [vmem:[#allocation5 + $0xbe0] sm:$0xff]
    %v525 = vld [vmem:[#allocation5 + $0xbe8] sm:$0xff]
    %v526 = vld [vmem:[#allocation5 + $0xbf0] sm:$0xff]
    %v527 = vld [vmem:[#allocation5 + $0xbf8] sm:$0xff]
    %v528 = vld [vmem:[#allocation5 + $0xc00] sm:$0xff]
    %v529 = vld [vmem:[#allocation5 + $0xc08] sm:$0xff]
    %v530 = vld [vmem:[#allocation5 + $0xc10] sm:$0xff]
    %v531 = vld [vmem:[#allocation5 + $0xc18] sm:$0xff]
    %v532 = vld [vmem:[#allocation5 + $0xc20] sm:$0xff]
    %v533 = vld [vmem:[#allocation5 + $0xc28] sm:$0xff]
    %v534 = vld [vmem:[#allocation5 + $0xc30] sm:$0xff]
    %v535 = vld [vmem:[#allocation5 + $0xc38] sm:$0xff]
    %v536 = vld [vmem:[#allocation5 + $0xc40] sm:$0xff]
    %v537 = vld [vmem:[#allocation5 + $0xc48] sm:$0xff]
    %v538 = vld [vmem:[#allocation5 + $0xc50] sm:$0xff]
    %v539 = vld [vmem:[#allocation5 + $0xc58] sm:$0xff]
    %v540 = vld [vmem:[#allocation5 + $0xc60] sm:$0xff]
    %v541 = vld [vmem:[#allocation5 + $0xc68] sm:$0xff]
    %v542 = vld [vmem:[#allocation5 + $0xc70] sm:$0xff]
    %v543 = vld [vmem:[#allocation5 + $0xc78] sm:$0xff]
    %v544 = vld [vmem:[#allocation5 + $0xc80] sm:$0xff]
    %v545 = vld [vmem:[#allocation5 + $0xc88] sm:$0xff]
    %v546 = vld [vmem:[#allocation5 + $0xc90] sm:$0xff]
    %v547 = vld [vmem:[#allocation5 + $0xc98] sm:$0xff]
    %v548 = vld [vmem:[#allocation5 + $0xca0] sm:$0xff]
    %v549 = vld [vmem:[#allocation5 + $0xca8] sm:$0xff]
    %v550 = vld [vmem:[#allocation5 + $0xcb0] sm:$0xff]
    %v551 = vld [vmem:[#allocation5 + $0xcb8] sm:$0xff]
    %v552 = vld [vmem:[#allocation5 + $0xcc0] sm:$0xff]
    %v553 = vld [vmem:[#allocation5 + $0xcc8] sm:$0xff]
    %v554 = vld [vmem:[#allocation5 + $0xcd0] sm:$0xff]
    %v555 = vld [vmem:[#allocation5 + $0xcd8] sm:$0xff]
    %v556 = vld [vmem:[#allocation5 + $0xce0] sm:$0xff]
    %v557 = vld [vmem:[#allocation5 + $0xce8] sm:$0xff]
    %v558 = vld [vmem:[#allocation5 + $0xcf0] sm:$0xff]
    %v559 = vld [vmem:[#allocation5 + $0xcf8] sm:$0xff]
    %v560 = vld [vmem:[#allocation5 + $0xd00] sm:$0xff]
    %v561 = vld [vmem:[#allocation5 + $0xd08] sm:$0xff]
    %v562 = vld [vmem:[#allocation5 + $0xd10] sm:$0xff]
    %v563 = vld [vmem:[#allocation5 + $0xd18] sm:$0xff]
    %v564 = vld [vmem:[#allocation5 + $0xd20] sm:$0xff]
    %v565 = vld [vmem:[#allocation5 + $0xd28] sm:$0xff]
    %v566 = vld [vmem:[#allocation5 + $0xd30] sm:$0xff]
    %v567 = vld [vmem:[#allocation5 + $0xd38] sm:$0xff]
    %v568 = vld [vmem:[#allocation5 + $0xd40] sm:$0xff]
    %v569 = vld [vmem:[#allocation5 + $0xd48] sm:$0xff]
    %v570 = vld [vmem:[#allocation5 + $0xd50] sm:$0xff]
    %v571 = vld [vmem:[#allocation5 + $0xd58] sm:$0xff]
    %v572 = vld [vmem:[#allocation5 + $0xd60] sm:$0xff]
    %v573 = vld [vmem:[#allocation5 + $0xd68] sm:$0xff]
    %v574 = vld [vmem:[#allocation5 + $0xd70] sm:$0xff]
    %v575 = vld [vmem:[#allocation5 + $0xd78] sm:$0xff]
    %v576 = vld [vmem:[#allocation5 + $0xd80] sm:$0xff]
    %v577 = vld [vmem:[#allocation5 + $0xd88] sm:$0xff]
    %v578 = vld [vmem:[#allocation5 + $0xd90] sm:$0xff]
    %v579 = vld [vmem:[#allocation5 + $0xd98] sm:$0xff]
    %v580 = vld [vmem:[#allocation5 + $0xda0] sm:$0xff]
    %v581 = vld [vmem:[#allocation5 + $0xda8] sm:$0xff]
    %v582 = vld [vmem:[#allocation5 + $0xdb0] sm:$0xff]
    %v583 = vld [vmem:[#allocation5 + $0xdb8] sm:$0xff]
    %v584 = vld [vmem:[#allocation5 + $0xdc0] sm:$0xff]
    %v585 = vld [vmem:[#allocation5 + $0xdc8] sm:$0xff]
    %v586 = vld [vmem:[#allocation5 + $0xdd0] sm:$0xff]
    %v587 = vld [vmem:[#allocation5 + $0xdd8] sm:$0xff]
    %v588 = vld [vmem:[#allocation5 + $0xde0] sm:$0xff]
    %v589 = vld [vmem:[#allocation5 + $0xde8] sm:$0xff]
    %v590 = vld [vmem:[#allocation5 + $0xdf0] sm:$0xff]
    %v591 = vld [vmem:[#allocation5 + $0xdf8] sm:$0xff]
    %v592 = vld [vmem:[#allocation7] sm:$0xf]
    %v594 = vperm.slane %v592, 0
    %v595 = vperm.slane %v592, 1
    %v596 = vperm.slane %v592, 2
    %v597 = vperm.slane %v592, 3
    %602 = vmatpush.msra.mxu0 %v204
    %603 = vmatpush.msra.mxu0 %v200
    %604 = vmatpush.msra.mxu0 %v196
    %605 = vmatpush.msra.mxu0 %v192
    %606 = vmatpush.msra.mxu0 %v188
    %607 = vmatpush.msra.mxu0 %v184
    %608 = vmatpush.msra.mxu0 %v180
    %609 = vmatpush.msra.mxu0 %v176
    %610 = vmatpush.msra.mxu0 %v172
    %611 = vmatpush.msra.mxu0 %v168
    %612 = vmatpush.msra.mxu0 %v164
    %613 = vmatpush.msra.mxu0 %v160
    %614 = vmatpush.msra.mxu0 %v156
    %615 = vmatpush.msra.mxu0 %v152
    %616 = vmatpush.msra.mxu0 %v148
    %617 = vmatpush.msra.mxu0 %v144
    %618 = vmatmul.f32.gmra.mxu0 %v130
    %v619 = vpop.f32.mrf.mxu0
    %v620 = vadd.f32 %v594, %v619
    %621 = vmatmul.f32.gmra.mxu0 %v137
    %v622 = vpop.f32.mrf.mxu0
    %v623 = vadd.f32 %v594, %v622
    %624 = vdwg.mxu0
    %625 = vmatpush.msra.mxu0 %v268
    %626 = vmatpush.msra.mxu0 %v264
    %627 = vmatpush.msra.mxu0 %v260
    %628 = vmatpush.msra.mxu0 %v256
    %629 = vmatpush.msra.mxu0 %v252
    %630 = vmatpush.msra.mxu0 %v248
    %631 = vmatpush.msra.mxu0 %v244
    %632 = vmatpush.msra.mxu0 %v240
    %633 = vmatpush.msra.mxu0 %v236
    %634 = vmatpush.msra.mxu0 %v232
    %635 = vmatpush.msra.mxu0 %v228
    %636 = vmatpush.msra.mxu0 %v224
    %637 = vmatpush.msra.mxu0 %v220
    %638 = vmatpush.msra.mxu0 %v216
    %639 = vmatpush.msra.mxu0 %v212
    %640 = vmatpush.msra.mxu0 %v208
    %641 = vmatmul.f32.gmra.mxu0 %v131
    %v642 = vpop.f32.mrf.mxu0
    %v643 = vadd.f32 %v620, %v642
    %644 = vmatmul.f32.gmra.mxu0 %v138
    %v645 = vpop.f32.mrf.mxu0
    %v646 = vadd.f32 %v623, %v645
    %647 = vdwg.mxu0
    %648 = vmatpush.msra.mxu0 %v332
    %649 = vmatpush.msra.mxu0 %v328
    %650 = vmatpush.msra.mxu0 %v324
    %651 = vmatpush.msra.mxu0 %v320
    %652 = vmatpush.msra.mxu0 %v316
    %653 = vmatpush.msra.mxu0 %v312
    %654 = vmatpush.msra.mxu0 %v308
    %655 = vmatpush.msra.mxu0 %v304
    %656 = vmatpush.msra.mxu0 %v300
    %657 = vmatpush.msra.mxu0 %v296
    %658 = vmatpush.msra.mxu0 %v292
    %659 = vmatpush.msra.mxu0 %v288
    %660 = vmatpush.msra.mxu0 %v284
    %661 = vmatpush.msra.mxu0 %v280
    %662 = vmatpush.msra.mxu0 %v276
    %663 = vmatpush.msra.mxu0 %v272
    %664 = vmatmul.f32.gmra.mxu0 %v132
    %v665 = vpop.f32.mrf.mxu0
    %v666 = vadd.f32 %v643, %v665
    %667 = vmatmul.f32.gmra.mxu0 %v139
    %v668 = vpop.f32.mrf.mxu0
    %v669 = vadd.f32 %v646, %v668
    %670 = vdwg.mxu0
    %671 = vmatpush.msra.mxu0 %v396
    %672 = vmatpush.msra.mxu0 %v392
    %673 = vmatpush.msra.mxu0 %v388
    %674 = vmatpush.msra.mxu0 %v384
    %675 = vmatpush.msra.mxu0 %v380
    %676 = vmatpush.msra.mxu0 %v376
    %677 = vmatpush.msra.mxu0 %v372
    %678 = vmatpush.msra.mxu0 %v368
    %679 = vmatpush.msra.mxu0 %v364
    %680 = vmatpush.msra.mxu0 %v360
    %681 = vmatpush.msra.mxu0 %v356
    %682 = vmatpush.msra.mxu0 %v352
    %683 = vmatpush.msra.mxu0 %v348
    %684 = vmatpush.msra.mxu0 %v344
    %685 = vmatpush.msra.mxu0 %v340
    %686 = vmatpush.msra.mxu0 %v336
    %687 = vmatmul.f32.gmra.mxu0 %v133
    %v688 = vpop.f32.mrf.mxu0
    %v689 = vadd.f32 %v666, %v688
    %690 = vmatmul.f32.gmra.mxu0 %v140
    %v691 = vpop.f32.mrf.mxu0
    %v692 = vadd.f32 %v669, %v691
    %693 = vdwg.mxu0
    %694 = vmatpush.msra.mxu0 %v460
    %695 = vmatpush.msra.mxu0 %v456
    %696 = vmatpush.msra.mxu0 %v452
    %697 = vmatpush.msra.mxu0 %v448
    %698 = vmatpush.msra.mxu0 %v444
    %699 = vmatpush.msra.mxu0 %v440
    %700 = vmatpush.msra.mxu0 %v436
    %701 = vmatpush.msra.mxu0 %v432
    %702 = vmatpush.msra.mxu0 %v428
    %703 = vmatpush.msra.mxu0 %v424
    %704 = vmatpush.msra.mxu0 %v420
    %705 = vmatpush.msra.mxu0 %v416
    %706 = vmatpush.msra.mxu0 %v412
    %707 = vmatpush.msra.mxu0 %v408
    %708 = vmatpush.msra.mxu0 %v404
    %709 = vmatpush.msra.mxu0 %v400
    %710 = vmatmul.f32.gmra.mxu0 %v134
    %v711 = vpop.f32.mrf.mxu0
    %v712 = vadd.f32 %v689, %v711
    %713 = vmatmul.f32.gmra.mxu0 %v141
    %v714 = vpop.f32.mrf.mxu0
    %v715 = vadd.f32 %v692, %v714
    %716 = vdwg.mxu0
    %717 = vmatpush.msra.mxu0 %v524
    %718 = vmatpush.msra.mxu0 %v520
    %719 = vmatpush.msra.mxu0 %v516
    %720 = vmatpush.msra.mxu0 %v512
    %721 = vmatpush.msra.mxu0 %v508
    %722 = vmatpush.msra.mxu0 %v504
    %723 = vmatpush.msra.mxu0 %v500
    %724 = vmatpush.msra.mxu0 %v496
    %725 = vmatpush.msra.mxu0 %v492
    %726 = vmatpush.msra.mxu0 %v488
    %727 = vmatpush.msra.mxu0 %v484
    %728 = vmatpush.msra.mxu0 %v480
    %729 = vmatpush.msra.mxu0 %v476
    %730 = vmatpush.msra.mxu0 %v472
    %731 = vmatpush.msra.mxu0 %v468
    %732 = vmatpush.msra.mxu0 %v464
    %733 = vmatmul.f32.gmra.mxu0 %v135
    %v734 = vpop.f32.mrf.mxu0
    %v735 = vadd.f32 %v712, %v734
    %736 = vmatmul.f32.gmra.mxu0 %v142
    %v737 = vpop.f32.mrf.mxu0
    %v738 = vadd.f32 %v715, %v737
    %739 = vdwg.mxu0
    %740 = vmatpush.msra.mxu0 %v588
    %741 = vmatpush.msra.mxu0 %v584
    %742 = vmatpush.msra.mxu0 %v580
    %743 = vmatpush.msra.mxu0 %v576
    %744 = vmatpush.msra.mxu0 %v572
    %745 = vmatpush.msra.mxu0 %v568
    %746 = vmatpush.msra.mxu0 %v564
    %747 = vmatpush.msra.mxu0 %v560
    %748 = vmatpush.msra.mxu0 %v556
    %749 = vmatpush.msra.mxu0 %v552
    %750 = vmatpush.msra.mxu0 %v548
    %751 = vmatpush.msra.mxu0 %v544
    %752 = vmatpush.msra.mxu0 %v540
    %753 = vmatpush.msra.mxu0 %v536
    %754 = vmatpush.msra.mxu0 %v532
    %755 = vmatpush.msra.mxu0 %v528
    %756 = vmatmul.f32.gmra.mxu0 %v136
    %v757 = vpop.f32.mrf.mxu0
    %v758 = vadd.f32 %v735, %v757
    %759 = vmatmul.f32.gmra.mxu0 %v143
    %v760 = vpop.f32.mrf.mxu0
    %v761 = vadd.f32 %v738, %v760
    %762 = vdwg.mxu0
    %763 = vmatpush.msra.mxu0 %v205
    %764 = vmatpush.msra.mxu0 %v201
    %765 = vmatpush.msra.mxu0 %v197
    %766 = vmatpush.msra.mxu0 %v193
    %767 = vmatpush.msra.mxu0 %v189
    %768 = vmatpush.msra.mxu0 %v185
    %769 = vmatpush.msra.mxu0 %v181
    %770 = vmatpush.msra.mxu0 %v177
    %771 = vmatpush.msra.mxu0 %v173
    %772 = vmatpush.msra.mxu0 %v169
    %773 = vmatpush.msra.mxu0 %v165
    %774 = vmatpush.msra.mxu0 %v161
    %775 = vmatpush.msra.mxu0 %v157
    %776 = vmatpush.msra.mxu0 %v153
    %777 = vmatpush.msra.mxu0 %v149
    %778 = vmatpush.msra.mxu0 %v145
    %779 = vmatmul.f32.gmra.mxu0 %v130
    %v780 = vpop.f32.mrf.mxu0
    %v781 = vadd.f32 %v595, %v780
    %782 = vmatmul.f32.gmra.mxu0 %v137
    %v783 = vpop.f32.mrf.mxu0
    %v784 = vadd.f32 %v595, %v783
    %785 = vdwg.mxu0
    %786 = vmatpush.msra.mxu0 %v269
    %787 = vmatpush.msra.mxu0 %v265
    %788 = vmatpush.msra.mxu0 %v261
    %789 = vmatpush.msra.mxu0 %v257
    %790 = vmatpush.msra.mxu0 %v253
    %791 = vmatpush.msra.mxu0 %v249
    %792 = vmatpush.msra.mxu0 %v245
    %793 = vmatpush.msra.mxu0 %v241
    %794 = vmatpush.msra.mxu0 %v237
    %795 = vmatpush.msra.mxu0 %v233
    %796 = vmatpush.msra.mxu0 %v229
    %797 = vmatpush.msra.mxu0 %v225
    %798 = vmatpush.msra.mxu0 %v221
    %799 = vmatpush.msra.mxu0 %v217
    %800 = vmatpush.msra.mxu0 %v213
    %801 = vmatpush.msra.mxu0 %v209
    %802 = vmatmul.f32.gmra.mxu0 %v131
    %v803 = vpop.f32.mrf.mxu0
    %v804 = vadd.f32 %v781, %v803
    %805 = vmatmul.f32.gmra.mxu0 %v138
    %v806 = vpop.f32.mrf.mxu0
    %v807 = vadd.f32 %v784, %v806
    %808 = vdwg.mxu0
    %809 = vmatpush.msra.mxu0 %v333
    %810 = vmatpush.msra.mxu0 %v329
    %811 = vmatpush.msra.mxu0 %v325
    %812 = vmatpush.msra.mxu0 %v321
    %813 = vmatpush.msra.mxu0 %v317
    %814 = vmatpush.msra.mxu0 %v313
    %815 = vmatpush.msra.mxu0 %v309
    %816 = vmatpush.msra.mxu0 %v305
    %817 = vmatpush.msra.mxu0 %v301
    %818 = vmatpush.msra.mxu0 %v297
    %819 = vmatpush.msra.mxu0 %v293
    %820 = vmatpush.msra.mxu0 %v289
    %821 = vmatpush.msra.mxu0 %v285
    %822 = vmatpush.msra.mxu0 %v281
    %823 = vmatpush.msra.mxu0 %v277
    %824 = vmatpush.msra.mxu0 %v273
    %825 = vmatmul.f32.gmra.mxu0 %v132
    %v826 = vpop.f32.mrf.mxu0
    %v827 = vadd.f32 %v804, %v826
    %828 = vmatmul.f32.gmra.mxu0 %v139
    %v829 = vpop.f32.mrf.mxu0
    %v830 = vadd.f32 %v807, %v829
    %831 = vdwg.mxu0
    %832 = vmatpush.msra.mxu0 %v397
    %833 = vmatpush.msra.mxu0 %v393
    %834 = vmatpush.msra.mxu0 %v389
    %835 = vmatpush.msra.mxu0 %v385
    %836 = vmatpush.msra.mxu0 %v381
    %837 = vmatpush.msra.mxu0 %v377
    %838 = vmatpush.msra.mxu0 %v373
    %839 = vmatpush.msra.mxu0 %v369
    %840 = vmatpush.msra.mxu0 %v365
    %841 = vmatpush.msra.mxu0 %v361
    %842 = vmatpush.msra.mxu0 %v357
    %843 = vmatpush.msra.mxu0 %v353
    %844 = vmatpush.msra.mxu0 %v349
    %845 = vmatpush.msra.mxu0 %v345
    %846 = vmatpush.msra.mxu0 %v341
    %847 = vmatpush.msra.mxu0 %v337
    %848 = vmatmul.f32.gmra.mxu0 %v133
    %v849 = vpop.f32.mrf.mxu0
    %v850 = vadd.f32 %v827, %v849
    %851 = vmatmul.f32.gmra.mxu0 %v140
    %v852 = vpop.f32.mrf.mxu0
    %v853 = vadd.f32 %v830, %v852
    %854 = vdwg.mxu0
    %855 = vmatpush.msra.mxu0 %v461
    %856 = vmatpush.msra.mxu0 %v457
    %857 = vmatpush.msra.mxu0 %v453
    %858 = vmatpush.msra.mxu0 %v449
    %859 = vmatpush.msra.mxu0 %v445
    %860 = vmatpush.msra.mxu0 %v441
    %861 = vmatpush.msra.mxu0 %v437
    %862 = vmatpush.msra.mxu0 %v433
    %863 = vmatpush.msra.mxu0 %v429
    %864 = vmatpush.msra.mxu0 %v425
    %865 = vmatpush.msra.mxu0 %v421
    %866 = vmatpush.msra.mxu0 %v417
    %867 = vmatpush.msra.mxu0 %v413
    %868 = vmatpush.msra.mxu0 %v409
    %869 = vmatpush.msra.mxu0 %v405
    %870 = vmatpush.msra.mxu0 %v401
    %871 = vmatmul.f32.gmra.mxu0 %v134
    %v872 = vpop.f32.mrf.mxu0
    %v873 = vadd.f32 %v850, %v872
    %874 = vmatmul.f32.gmra.mxu0 %v141
    %v875 = vpop.f32.mrf.mxu0
    %v876 = vadd.f32 %v853, %v875
    %877 = vdwg.mxu0
    %878 = vmatpush.msra.mxu0 %v525
    %879 = vmatpush.msra.mxu0 %v521
    %880 = vmatpush.msra.mxu0 %v517
    %881 = vmatpush.msra.mxu0 %v513
    %882 = vmatpush.msra.mxu0 %v509
    %883 = vmatpush.msra.mxu0 %v505
    %884 = vmatpush.msra.mxu0 %v501
    %885 = vmatpush.msra.mxu0 %v497
    %886 = vmatpush.msra.mxu0 %v493
    %887 = vmatpush.msra.mxu0 %v489
    %888 = vmatpush.msra.mxu0 %v485
    %889 = vmatpush.msra.mxu0 %v481
    %890 = vmatpush.msra.mxu0 %v477
    %891 = vmatpush.msra.mxu0 %v473
    %892 = vmatpush.msra.mxu0 %v469
    %893 = vmatpush.msra.mxu0 %v465
    %894 = vmatmul.f32.gmra.mxu0 %v135
    %v895 = vpop.f32.mrf.mxu0
    %v896 = vadd.f32 %v873, %v895
    %897 = vmatmul.f32.gmra.mxu0 %v142
    %v898 = vpop.f32.mrf.mxu0
    %v899 = vadd.f32 %v876, %v898
    %900 = vdwg.mxu0
    %901 = vmatpush.msra.mxu0 %v589
    %902 = vmatpush.msra.mxu0 %v585
    %903 = vmatpush.msra.mxu0 %v581
    %904 = vmatpush.msra.mxu0 %v577
    %905 = vmatpush.msra.mxu0 %v573
    %906 = vmatpush.msra.mxu0 %v569
    %907 = vmatpush.msra.mxu0 %v565
    %908 = vmatpush.msra.mxu0 %v561
    %909 = vmatpush.msra.mxu0 %v557
    %910 = vmatpush.msra.mxu0 %v553
    %911 = vmatpush.msra.mxu0 %v549
    %912 = vmatpush.msra.mxu0 %v545
    %913 = vmatpush.msra.mxu0 %v541
    %914 = vmatpush.msra.mxu0 %v537
    %915 = vmatpush.msra.mxu0 %v533
    %916 = vmatpush.msra.mxu0 %v529
    %917 = vmatmul.f32.gmra.mxu0 %v136
    %v918 = vpop.f32.mrf.mxu0
    %v919 = vadd.f32 %v896, %v918
    %920 = vmatmul.f32.gmra.mxu0 %v143
    %v921 = vpop.f32.mrf.mxu0
    %v922 = vadd.f32 %v899, %v921
    %923 = vdwg.mxu0
    %924 = vmatpush.msra.mxu0 %v206
    %925 = vmatpush.msra.mxu0 %v202
    %926 = vmatpush.msra.mxu0 %v198
    %927 = vmatpush.msra.mxu0 %v194
    %928 = vmatpush.msra.mxu0 %v190
    %929 = vmatpush.msra.mxu0 %v186
    %930 = vmatpush.msra.mxu0 %v182
    %931 = vmatpush.msra.mxu0 %v178
    %932 = vmatpush.msra.mxu0 %v174
    %933 = vmatpush.msra.mxu0 %v170
    %934 = vmatpush.msra.mxu0 %v166
    %935 = vmatpush.msra.mxu0 %v162
    %936 = vmatpush.msra.mxu0 %v158
    %937 = vmatpush.msra.mxu0 %v154
    %938 = vmatpush.msra.mxu0 %v150
    %939 = vmatpush.msra.mxu0 %v146
    %940 = vmatmul.f32.gmra.mxu0 %v130
    %v941 = vpop.f32.mrf.mxu0
    %v942 = vadd.f32 %v596, %v941
    %943 = vmatmul.f32.gmra.mxu0 %v137
    %v944 = vpop.f32.mrf.mxu0
    %v945 = vadd.f32 %v596, %v944
    %946 = vdwg.mxu0
    %947 = vmatpush.msra.mxu0 %v270
    %948 = vmatpush.msra.mxu0 %v266
    %949 = vmatpush.msra.mxu0 %v262
    %950 = vmatpush.msra.mxu0 %v258
    %951 = vmatpush.msra.mxu0 %v254
    %952 = vmatpush.msra.mxu0 %v250
    %953 = vmatpush.msra.mxu0 %v246
    %954 = vmatpush.msra.mxu0 %v242
    %955 = vmatpush.msra.mxu0 %v238
    %956 = vmatpush.msra.mxu0 %v234
    %957 = vmatpush.msra.mxu0 %v230
    %958 = vmatpush.msra.mxu0 %v226
    %959 = vmatpush.msra.mxu0 %v222
    %960 = vmatpush.msra.mxu0 %v218
    %961 = vmatpush.msra.mxu0 %v214
    %962 = vmatpush.msra.mxu0 %v210
    %963 = vmatmul.f32.gmra.mxu0 %v131
    %v964 = vpop.f32.mrf.mxu0
    %v965 = vadd.f32 %v942, %v964
    %966 = vmatmul.f32.gmra.mxu0 %v138
    %v967 = vpop.f32.mrf.mxu0
    %v968 = vadd.f32 %v945, %v967
    %969 = vdwg.mxu0
    %970 = vmatpush.msra.mxu0 %v334
    %971 = vmatpush.msra.mxu0 %v330
    %972 = vmatpush.msra.mxu0 %v326
    %973 = vmatpush.msra.mxu0 %v322
    %974 = vmatpush.msra.mxu0 %v318
    %975 = vmatpush.msra.mxu0 %v314
    %976 = vmatpush.msra.mxu0 %v310
    %977 = vmatpush.msra.mxu0 %v306
    %978 = vmatpush.msra.mxu0 %v302
    %979 = vmatpush.msra.mxu0 %v298
    %980 = vmatpush.msra.mxu0 %v294
    %981 = vmatpush.msra.mxu0 %v290
    %982 = vmatpush.msra.mxu0 %v286
    %983 = vmatpush.msra.mxu0 %v282
    %984 = vmatpush.msra.mxu0 %v278
    %985 = vmatpush.msra.mxu0 %v274
    %986 = vmatmul.f32.gmra.mxu0 %v132
    %v987 = vpop.f32.mrf.mxu0
    %v988 = vadd.f32 %v965, %v987
    %989 = vmatmul.f32.gmra.mxu0 %v139
    %v990 = vpop.f32.mrf.mxu0
    %v991 = vadd.f32 %v968, %v990
    %992 = vdwg.mxu0
    %993 = vmatpush.msra.mxu0 %v398
    %994 = vmatpush.msra.mxu0 %v394
    %995 = vmatpush.msra.mxu0 %v390
    %996 = vmatpush.msra.mxu0 %v386
    %997 = vmatpush.msra.mxu0 %v382
    %998 = vmatpush.msra.mxu0 %v378
    %999 = vmatpush.msra.mxu0 %v374
    %1000 = vmatpush.msra.mxu0 %v370
    %1001 = vmatpush.msra.mxu0 %v366
    %1002 = vmatpush.msra.mxu0 %v362
    %1003 = vmatpush.msra.mxu0 %v358
    %1004 = vmatpush.msra.mxu0 %v354
    %1005 = vmatpush.msra.mxu0 %v350
    %1006 = vmatpush.msra.mxu0 %v346
    %1007 = vmatpush.msra.mxu0 %v342
    %1008 = vmatpush.msra.mxu0 %v338
    %1009 = vmatmul.f32.gmra.mxu0 %v133
    %v1010 = vpop.f32.mrf.mxu0
    %v1011 = vadd.f32 %v988, %v1010
    %1012 = vmatmul.f32.gmra.mxu0 %v140
    %v1013 = vpop.f32.mrf.mxu0
    %v1014 = vadd.f32 %v991, %v1013
    %1015 = vdwg.mxu0
    %1016 = vmatpush.msra.mxu0 %v462
    %1017 = vmatpush.msra.mxu0 %v458
    %1018 = vmatpush.msra.mxu0 %v454
    %1019 = vmatpush.msra.mxu0 %v450
    %1020 = vmatpush.msra.mxu0 %v446
    %1021 = vmatpush.msra.mxu0 %v442
    %1022 = vmatpush.msra.mxu0 %v438
    %1023 = vmatpush.msra.mxu0 %v434
    %1024 = vmatpush.msra.mxu0 %v430
    %1025 = vmatpush.msra.mxu0 %v426
    %1026 = vmatpush.msra.mxu0 %v422
    %1027 = vmatpush.msra.mxu0 %v418
    %1028 = vmatpush.msra.mxu0 %v414
    %1029 = vmatpush.msra.mxu0 %v410
    %1030 = vmatpush.msra.mxu0 %v406
    %1031 = vmatpush.msra.mxu0 %v402
    %1032 = vmatmul.f32.gmra.mxu0 %v134
    %v1033 = vpop.f32.mrf.mxu0
    %v1034 = vadd.f32 %v1011, %v1033
    %1035 = vmatmul.f32.gmra.mxu0 %v141
    %v1036 = vpop.f32.mrf.mxu0
    %v1037 = vadd.f32 %v1014, %v1036
    %1038 = vdwg.mxu0
    %1039 = vmatpush.msra.mxu0 %v526
    %1040 = vmatpush.msra.mxu0 %v522
    %1041 = vmatpush.msra.mxu0 %v518
    %1042 = vmatpush.msra.mxu0 %v514
    %1043 = vmatpush.msra.mxu0 %v510
    %1044 = vmatpush.msra.mxu0 %v506
    %1045 = vmatpush.msra.mxu0 %v502
    %1046 = vmatpush.msra.mxu0 %v498
    %1047 = vmatpush.msra.mxu0 %v494
    %1048 = vmatpush.msra.mxu0 %v490
    %1049 = vmatpush.msra.mxu0 %v486
    %1050 = vmatpush.msra.mxu0 %v482
    %1051 = vmatpush.msra.mxu0 %v478
    %1052 = vmatpush.msra.mxu0 %v474
    %1053 = vmatpush.msra.mxu0 %v470
    %1054 = vmatpush.msra.mxu0 %v466
    %1055 = vmatmul.f32.gmra.mxu0 %v135
    %v1056 = vpop.f32.mrf.mxu0
    %v1057 = vadd.f32 %v1034, %v1056
    %1058 = vmatmul.f32.gmra.mxu0 %v142
    %v1059 = vpop.f32.mrf.mxu0
    %v1060 = vadd.f32 %v1037, %v1059
    %1061 = vdwg.mxu0
    %1062 = vmatpush.msra.mxu0 %v590
    %1063 = vmatpush.msra.mxu0 %v586
    %1064 = vmatpush.msra.mxu0 %v582
    %1065 = vmatpush.msra.mxu0 %v578
    %1066 = vmatpush.msra.mxu0 %v574
    %1067 = vmatpush.msra.mxu0 %v570
    %1068 = vmatpush.msra.mxu0 %v566
    %1069 = vmatpush.msra.mxu0 %v562
    %1070 = vmatpush.msra.mxu0 %v558
    %1071 = vmatpush.msra.mxu0 %v554
    %1072 = vmatpush.msra.mxu0 %v550
    %1073 = vmatpush.msra.mxu0 %v546
    %1074 = vmatpush.msra.mxu0 %v542
    %1075 = vmatpush.msra.mxu0 %v538
    %1076 = vmatpush.msra.mxu0 %v534
    %1077 = vmatpush.msra.mxu0 %v530
    %1078 = vmatmul.f32.gmra.mxu0 %v136
    %v1079 = vpop.f32.mrf.mxu0
    %v1080 = vadd.f32 %v1057, %v1079
    %1081 = vmatmul.f32.gmra.mxu0 %v143
    %v1082 = vpop.f32.mrf.mxu0
    %v1083 = vadd.f32 %v1060, %v1082
    %1084 = vdwg.mxu0
    %1085 = vmatpush.msra.mxu0 %v207
    %1086 = vmatpush.msra.mxu0 %v203
    %1087 = vmatpush.msra.mxu0 %v199
    %1088 = vmatpush.msra.mxu0 %v195
    %1089 = vmatpush.msra.mxu0 %v191
    %1090 = vmatpush.msra.mxu0 %v187
    %1091 = vmatpush.msra.mxu0 %v183
    %1092 = vmatpush.msra.mxu0 %v179
    %1093 = vmatpush.msra.mxu0 %v175
    %1094 = vmatpush.msra.mxu0 %v171
    %1095 = vmatpush.msra.mxu0 %v167
    %1096 = vmatpush.msra.mxu0 %v163
    %1097 = vmatpush.msra.mxu0 %v159
    %1098 = vmatpush.msra.mxu0 %v155
    %1099 = vmatpush.msra.mxu0 %v151
    %1100 = vmatpush.msra.mxu0 %v147
    %1101 = vmatmul.f32.gmra.mxu0 %v130
    %v1102 = vpop.f32.mrf.mxu0
    %v1103 = vadd.f32 %v597, %v1102
    %1104 = vmatmul.f32.gmra.mxu0 %v137
    %v1105 = vpop.f32.mrf.mxu0
    %v1106 = vadd.f32 %v597, %v1105
    %1107 = vdwg.mxu0
    %1108 = vmatpush.msra.mxu0 %v271
    %1109 = vmatpush.msra.mxu0 %v267
    %1110 = vmatpush.msra.mxu0 %v263
    %1111 = vmatpush.msra.mxu0 %v259
    %1112 = vmatpush.msra.mxu0 %v255
    %1113 = vmatpush.msra.mxu0 %v251
    %1114 = vmatpush.msra.mxu0 %v247
    %1115 = vmatpush.msra.mxu0 %v243
    %1116 = vmatpush.msra.mxu0 %v239
    %1117 = vmatpush.msra.mxu0 %v235
    %1118 = vmatpush.msra.mxu0 %v231
    %1119 = vmatpush.msra.mxu0 %v227
    %1120 = vmatpush.msra.mxu0 %v223
    %1121 = vmatpush.msra.mxu0 %v219
    %1122 = vmatpush.msra.mxu0 %v215
    %1123 = vmatpush.msra.mxu0 %v211
    %1124 = vmatmul.f32.gmra.mxu0 %v131
    %v1125 = vpop.f32.mrf.mxu0
    %v1126 = vadd.f32 %v1103, %v1125
    %1127 = vmatmul.f32.gmra.mxu0 %v138
    %v1128 = vpop.f32.mrf.mxu0
    %v1129 = vadd.f32 %v1106, %v1128
    %1130 = vdwg.mxu0
    %1131 = vmatpush.msra.mxu0 %v335
    %1132 = vmatpush.msra.mxu0 %v331
    %1133 = vmatpush.msra.mxu0 %v327
    %1134 = vmatpush.msra.mxu0 %v323
    %1135 = vmatpush.msra.mxu0 %v319
    %1136 = vmatpush.msra.mxu0 %v315
    %1137 = vmatpush.msra.mxu0 %v311
    %1138 = vmatpush.msra.mxu0 %v307
    %1139 = vmatpush.msra.mxu0 %v303
    %1140 = vmatpush.msra.mxu0 %v299
    %1141 = vmatpush.msra.mxu0 %v295
    %1142 = vmatpush.msra.mxu0 %v291
    %1143 = vmatpush.msra.mxu0 %v287
    %1144 = vmatpush.msra.mxu0 %v283
    %1145 = vmatpush.msra.mxu0 %v279
    %1146 = vmatpush.msra.mxu0 %v275
    %1147 = vmatmul.f32.gmra.mxu0 %v132
    %v1148 = vpop.f32.mrf.mxu0
    %v1149 = vadd.f32 %v1126, %v1148
    %1150 = vmatmul.f32.gmra.mxu0 %v139
    %v1151 = vpop.f32.mrf.mxu0
    %v1152 = vadd.f32 %v1129, %v1151
    %1153 = vdwg.mxu0
    %1154 = vmatpush.msra.mxu0 %v399
    %1155 = vmatpush.msra.mxu0 %v395
    %1156 = vmatpush.msra.mxu0 %v391
    %1157 = vmatpush.msra.mxu0 %v387
    %1158 = vmatpush.msra.mxu0 %v383
    %1159 = vmatpush.msra.mxu0 %v379
    %1160 = vmatpush.msra.mxu0 %v375
    %1161 = vmatpush.msra.mxu0 %v371
    %1162 = vmatpush.msra.mxu0 %v367
    %1163 = vmatpush.msra.mxu0 %v363
    %1164 = vmatpush.msra.mxu0 %v359
    %1165 = vmatpush.msra.mxu0 %v355
    %1166 = vmatpush.msra.mxu0 %v351
    %1167 = vmatpush.msra.mxu0 %v347
    %1168 = vmatpush.msra.mxu0 %v343
    %1169 = vmatpush.msra.mxu0 %v339
    %1170 = vmatmul.f32.gmra.mxu0 %v133
    %v1171 = vpop.f32.mrf.mxu0
    %v1172 = vadd.f32 %v1149, %v1171
    %1173 = vmatmul.f32.gmra.mxu0 %v140
    %v1174 = vpop.f32.mrf.mxu0
    %v1175 = vadd.f32 %v1152, %v1174
    %1176 = vdwg.mxu0
    %1177 = vmatpush.msra.mxu0 %v463
    %1178 = vmatpush.msra.mxu0 %v459
    %1179 = vmatpush.msra.mxu0 %v455
    %1180 = vmatpush.msra.mxu0 %v451
    %1181 = vmatpush.msra.mxu0 %v447
    %1182 = vmatpush.msra.mxu0 %v443
    %1183 = vmatpush.msra.mxu0 %v439
    %1184 = vmatpush.msra.mxu0 %v435
    %1185 = vmatpush.msra.mxu0 %v431
    %1186 = vmatpush.msra.mxu0 %v427
    %1187 = vmatpush.msra.mxu0 %v423
    %1188 = vmatpush.msra.mxu0 %v419
    %1189 = vmatpush.msra.mxu0 %v415
    %1190 = vmatpush.msra.mxu0 %v411
    %1191 = vmatpush.msra.mxu0 %v407
    %1192 = vmatpush.msra.mxu0 %v403
    %1193 = vmatmul.f32.gmra.mxu0 %v134
    %v1194 = vpop.f32.mrf.mxu0
    %v1195 = vadd.f32 %v1172, %v1194
    %1196 = vmatmul.f32.gmra.mxu0 %v141
    %v1197 = vpop.f32.mrf.mxu0
    %v1198 = vadd.f32 %v1175, %v1197
    %1199 = vdwg.mxu0
    %1200 = vmatpush.msra.mxu0 %v527
    %1201 = vmatpush.msra.mxu0 %v523
    %1202 = vmatpush.msra.mxu0 %v519
    %1203 = vmatpush.msra.mxu0 %v515
    %1204 = vmatpush.msra.mxu0 %v511
    %1205 = vmatpush.msra.mxu0 %v507
    %1206 = vmatpush.msra.mxu0 %v503
    %1207 = vmatpush.msra.mxu0 %v499
    %1208 = vmatpush.msra.mxu0 %v495
    %1209 = vmatpush.msra.mxu0 %v491
    %1210 = vmatpush.msra.mxu0 %v487
    %1211 = vmatpush.msra.mxu0 %v483
    %1212 = vmatpush.msra.mxu0 %v479
    %1213 = vmatpush.msra.mxu0 %v475
    %1214 = vmatpush.msra.mxu0 %v471
    %1215 = vmatpush.msra.mxu0 %v467
    %1216 = vmatmul.f32.gmra.mxu0 %v135
    %v1217 = vpop.f32.mrf.mxu0
    %v1218 = vadd.f32 %v1195, %v1217
    %1219 = vmatmul.f32.gmra.mxu0 %v142
    %v1220 = vpop.f32.mrf.mxu0
    %v1221 = vadd.f32 %v1198, %v1220
    %1222 = vdwg.mxu0
    %1223 = vmatpush.msra.mxu0 %v591
    %1224 = vmatpush.msra.mxu0 %v587
    %1225 = vmatpush.msra.mxu0 %v583
    %1226 = vmatpush.msra.mxu0 %v579
    %1227 = vmatpush.msra.mxu0 %v575
    %1228 = vmatpush.msra.mxu0 %v571
    %1229 = vmatpush.msra.mxu0 %v567
    %1230 = vmatpush.msra.mxu0 %v563
    %1231 = vmatpush.msra.mxu0 %v559
    %1232 = vmatpush.msra.mxu0 %v555
    %1233 = vmatpush.msra.mxu0 %v551
    %1234 = vmatpush.msra.mxu0 %v547
    %1235 = vmatpush.msra.mxu0 %v543
    %1236 = vmatpush.msra.mxu0 %v539
    %1237 = vmatpush.msra.mxu0 %v535
    %1238 = vmatpush.msra.mxu0 %v531
    %1239 = vmatmul.f32.gmra.mxu0 %v136
    %v1240 = vpop.f32.mrf.mxu0
    %v1241 = vadd.f32 %v1218, %v1240
    %1242 = vmatmul.f32.gmra.mxu0 %v143
    %v1243 = vpop.f32.mrf.mxu0
    %v1244 = vadd.f32 %v1221, %v1243
    %1245 = vdwg.mxu0
    %v1246 = vmax.f32 %v758, 0.0
    %v1247 = vmax.f32 %v919, 0.0
    %v1248 = vmax.f32 %v1080, 0.0
    %v1249 = vmax.f32 %v1241, 0.0
    %v1250 = vmax.f32 %v761, 0.0
    %v1251 = vmax.f32 %v922, 0.0
    %v1252 = vmax.f32 %v1083, 0.0
    %v1253 = vmax.f32 %v1244, 0.0
    %v1254 = vld [vmem:[#allocation8] sm:$0xff]
    %v1255 = vld [vmem:[#allocation8 + $0x8] sm:$0xff]
    %v1256 = vld [vmem:[#allocation8 + $0x10] sm:$0xff]
    %v1257 = vld [vmem:[#allocation8 + $0x18] sm:$0xff]
    %v1258 = vld [vmem:[#allocation8 + $0x20] sm:$0xff]
    %v1259 = vld [vmem:[#allocation8 + $0x28] sm:$0xff]
    %v1260 = vld [vmem:[#allocation8 + $0x30] sm:$0xff]
    %v1261 = vld [vmem:[#allocation8 + $0x38] sm:$0xff]
    %v1262 = vld [vmem:[#allocation8 + $0x40] sm:$0xff]
    %v1263 = vld [vmem:[#allocation8 + $0x48] sm:$0xff]
    %v1264 = vld [vmem:[#allocation8 + $0x50] sm:$0xff]
    %v1265 = vld [vmem:[#allocation8 + $0x58] sm:$0xff]
    %v1266 = vld [vmem:[#allocation8 + $0x60] sm:$0xff]
    %v1267 = vld [vmem:[#allocation8 + $0x68] sm:$0xff]
    %v1268 = vld [vmem:[#allocation8 + $0x70] sm:$0xff]
    %v1269 = vld [vmem:[#allocation8 + $0x78] sm:$0xff]
    %v1270 = vld [vmem:[#allocation8 + $0x80] sm:$0xff]
    %v1271 = vld [vmem:[#allocation8 + $0x88] sm:$0xff]
    %v1272 = vld [vmem:[#allocation8 + $0x90] sm:$0xff]
    %v1273 = vld [vmem:[#allocation8 + $0x98] sm:$0xff]
    %v1274 = vld [vmem:[#allocation8 + $0xa0] sm:$0xff]
    %v1275 = vld [vmem:[#allocation8 + $0xa8] sm:$0xff]
    %v1276 = vld [vmem:[#allocation8 + $0xb0] sm:$0xff]
    %v1277 = vld [vmem:[#allocation8 + $0xb8] sm:$0xff]
    %v1278 = vld [vmem:[#allocation8 + $0xc0] sm:$0xff]
    %v1279 = vld [vmem:[#allocation8 + $0xc8] sm:$0xff]
    %v1280 = vld [vmem:[#allocation8 + $0xd0] sm:$0xff]
    %v1281 = vld [vmem:[#allocation8 + $0xd8] sm:$0xff]
    %v1282 = vld [vmem:[#allocation8 + $0xe0] sm:$0xff]
    %v1283 = vld [vmem:[#allocation8 + $0xe8] sm:$0xff]
    %v1284 = vld [vmem:[#allocation8 + $0xf0] sm:$0xff]
    %v1285 = vld [vmem:[#allocation8 + $0xf8] sm:$0xff]
    %v1286 = vld [vmem:[#allocation8 + $0x100] sm:$0xff]
    %v1287 = vld [vmem:[#allocation8 + $0x108] sm:$0xff]
    %v1288 = vld [vmem:[#allocation8 + $0x110] sm:$0xff]
    %v1289 = vld [vmem:[#allocation8 + $0x118] sm:$0xff]
    %v1290 = vld [vmem:[#allocation8 + $0x120] sm:$0xff]
    %v1291 = vld [vmem:[#allocation8 + $0x128] sm:$0xff]
    %v1292 = vld [vmem:[#allocation8 + $0x130] sm:$0xff]
    %v1293 = vld [vmem:[#allocation8 + $0x138] sm:$0xff]
    %v1294 = vld [vmem:[#allocation8 + $0x140] sm:$0xff]
    %v1295 = vld [vmem:[#allocation8 + $0x148] sm:$0xff]
    %v1296 = vld [vmem:[#allocation8 + $0x150] sm:$0xff]
    %v1297 = vld [vmem:[#allocation8 + $0x158] sm:$0xff]
    %v1298 = vld [vmem:[#allocation8 + $0x160] sm:$0xff]
    %v1299 = vld [vmem:[#allocation8 + $0x168] sm:$0xff]
    %v1300 = vld [vmem:[#allocation8 + $0x170] sm:$0xff]
    %v1301 = vld [vmem:[#allocation8 + $0x178] sm:$0xff]
    %v1302 = vld [vmem:[#allocation8 + $0x180] sm:$0xff]
    %v1303 = vld [vmem:[#allocation8 + $0x188] sm:$0xff]
    %v1304 = vld [vmem:[#allocation8 + $0x190] sm:$0xff]
    %v1305 = vld [vmem:[#allocation8 + $0x198] sm:$0xff]
    %v1306 = vld [vmem:[#allocation8 + $0x1a0] sm:$0xff]
    %v1307 = vld [vmem:[#allocation8 + $0x1a8] sm:$0xff]
    %v1308 = vld [vmem:[#allocation8 + $0x1b0] sm:$0xff]
    %v1309 = vld [vmem:[#allocation8 + $0x1b8] sm:$0xff]
    %v1310 = vld [vmem:[#allocation8 + $0x1c0] sm:$0xff]
    %v1311 = vld [vmem:[#allocation8 + $0x1c8] sm:$0xff]
    %v1312 = vld [vmem:[#allocation8 + $0x1d0] sm:$0xff]
    %v1313 = vld [vmem:[#allocation8 + $0x1d8] sm:$0xff]
    %v1314 = vld [vmem:[#allocation8 + $0x1e0] sm:$0xff]
    %v1315 = vld [vmem:[#allocation8 + $0x1e8] sm:$0xff]
    %v1316 = vld [vmem:[#allocation8 + $0x1f0] sm:$0xff]
    %v1317 = vld [vmem:[#allocation8 + $0x1f8] sm:$0xff]
    %v1318 = vld [vmem:[#allocation10] sm:$0x1]
    %v1320 = vperm.slane %v1318, 0
    %1322 = vmatpush.msra.mxu0 %v1269
    %1323 = vmatpush.msra.mxu0 %v1268
    %1324 = vmatpush.msra.mxu0 %v1267
    %1325 = vmatpush.msra.mxu0 %v1266
    %1326 = vmatpush.msra.mxu0 %v1265
    %1327 = vmatpush.msra.mxu0 %v1264
    %1328 = vmatpush.msra.mxu0 %v1263
    %1329 = vmatpush.msra.mxu0 %v1262
    %1330 = vmatpush.msra.mxu0 %v1261
    %1331 = vmatpush.msra.mxu0 %v1260
    %1332 = vmatpush.msra.mxu0 %v1259
    %1333 = vmatpush.msra.mxu0 %v1258
    %1334 = vmatpush.msra.mxu0 %v1257
    %1335 = vmatpush.msra.mxu0 %v1256
    %1336 = vmatpush.msra.mxu0 %v1255
    %1337 = vmatpush.msra.mxu0 %v1254
    %1338 = vmatmul.f32.gmra.mxu0 %v1246
    %v1339 = vpop.f32.mrf.mxu0
    %v1340 = vadd.f32 %v1320, %v1339
    %1341 = vmatmul.f32.gmra.mxu0 %v1250
    %v1342 = vpop.f32.mrf.mxu0
    %v1343 = vadd.f32 %v1320, %v1342
    %1344 = vdwg.mxu0
    %1345 = vmatpush.msra.mxu0 %v1285
    %1346 = vmatpush.msra.mxu0 %v1284
    %1347 = vmatpush.msra.mxu0 %v1283
    %1348 = vmatpush.msra.mxu0 %v1282
    %1349 = vmatpush.msra.mxu0 %v1281
    %1350 = vmatpush.msra.mxu0 %v1280
    %1351 = vmatpush.msra.mxu0 %v1279
    %1352 = vmatpush.msra.mxu0 %v1278
    %1353 = vmatpush.msra.mxu0 %v1277
    %1354 = vmatpush.msra.mxu0 %v1276
    %1355 = vmatpush.msra.mxu0 %v1275
    %1356 = vmatpush.msra.mxu0 %v1274
    %1357 = vmatpush.msra.mxu0 %v1273
    %1358 = vmatpush.msra.mxu0 %v1272
    %1359 = vmatpush.msra.mxu0 %v1271
    %1360 = vmatpush.msra.mxu0 %v1270
    %1361 = vmatmul.f32.gmra.mxu0 %v1247
    %v1362 = vpop.f32.mrf.mxu0
    %v1363 = vadd.f32 %v1340, %v1362
    %1364 = vmatmul.f32.gmra.mxu0 %v1251
    %v1365 = vpop.f32.mrf.mxu0
    %v1366 = vadd.f32 %v1343, %v1365
    %1367 = vdwg.mxu0
    %1368 = vmatpush.msra.mxu0 %v1301
    %1369 = vmatpush.msra.mxu0 %v1300
    %1370 = vmatpush.msra.mxu0 %v1299
    %1371 = vmatpush.msra.mxu0 %v1298
    %1372 = vmatpush.msra.mxu0 %v1297
    %1373 = vmatpush.msra.mxu0 %v1296
    %1374 = vmatpush.msra.mxu0 %v1295
    %1375 = vmatpush.msra.mxu0 %v1294
    %1376 = vmatpush.msra.mxu0 %v1293
    %1377 = vmatpush.msra.mxu0 %v1292
    %1378 = vmatpush.msra.mxu0 %v1291
    %1379 = vmatpush.msra.mxu0 %v1290
    %1380 = vmatpush.msra.mxu0 %v1289
    %1381 = vmatpush.msra.mxu0 %v1288
    %1382 = vmatpush.msra.mxu0 %v1287
    %1383 = vmatpush.msra.mxu0 %v1286
    %1384 = vmatmul.f32.gmra.mxu0 %v1248
    %v1385 = vpop.f32.mrf.mxu0
    %v1386 = vadd.f32 %v1363, %v1385
    %1387 = vmatmul.f32.gmra.mxu0 %v1252
    %v1388 = vpop.f32.mrf.mxu0
    %v1389 = vadd.f32 %v1366, %v1388
    %1390 = vdwg.mxu0
    %1391 = vmatpush.msra.mxu0 %v1317
    %1392 = vmatpush.msra.mxu0 %v1316
    %1393 = vmatpush.msra.mxu0 %v1315
    %1394 = vmatpush.msra.mxu0 %v1314
    %1395 = vmatpush.msra.mxu0 %v1313
    %1396 = vmatpush.msra.mxu0 %v1312
    %1397 = vmatpush.msra.mxu0 %v1311
    %1398 = vmatpush.msra.mxu0 %v1310
    %1399 = vmatpush.msra.mxu0 %v1309
    %1400 = vmatpush.msra.mxu0 %v1308
    %1401 = vmatpush.msra.mxu0 %v1307
    %1402 = vmatpush.msra.mxu0 %v1306
    %1403 = vmatpush.msra.mxu0 %v1305
    %1404 = vmatpush.msra.mxu0 %v1304
    %1405 = vmatpush.msra.mxu0 %v1303
    %1406 = vmatpush.msra.mxu0 %v1302
    %1407 = vmatmul.f32.gmra.mxu0 %v1249
    %v1408 = vpop.f32.mrf.mxu0
    %v1409 = vadd.f32 %v1386, %v1408
    %1410 = vmatmul.f32.gmra.mxu0 %v1253
    %v1411 = vpop.f32.mrf.mxu0
    %v1412 = vadd.f32 %v1389, %v1411
    %1413 = vdwg.mxu0
    %v1414 = vmax.f32 %v1409, 0.0
    %v1415 = vmax.f32 %v1412, 0.0
    %v1416 = vld [vmem:[#allocation11] sm:$0xff]
    %v1417 = vld [vmem:[#allocation11 + $0x8] sm:$0xff]
    %v1418 = vld [vmem:[#allocation11 + $0x10] sm:$0xff]
    %v1419 = vld [vmem:[#allocation11 + $0x18] sm:$0xff]
    %v1420 = vld [vmem:[#allocation11 + $0x20] sm:$0xff]
    %v1421 = vld [vmem:[#allocation11 + $0x28] sm:$0xff]
    %v1422 = vld [vmem:[#allocation11 + $0x30] sm:$0xff]
    %v1423 = vld [vmem:[#allocation11 + $0x38] sm:$0xff]
    %v1424 = vld [vmem:[#allocation11 + $0x40] sm:$0xff]
    %v1425 = vld [vmem:[#allocation11 + $0x48] sm:$0xff]
    %v1426 = vld [vmem:[#allocation11 + $0x50] sm:$0xff]
    %v1427 = vld [vmem:[#allocation11 + $0x58] sm:$0xff]
    %v1428 = vld [vmem:[#allocation11 + $0x60] sm:$0xff]
    %v1429 = vld [vmem:[#allocation11 + $0x68] sm:$0xff]
    %v1430 = vld [vmem:[#allocation11 + $0x70] sm:$0xff]
    %v1431 = vld [vmem:[#allocation11 + $0x78] sm:$0xff]
    %v1432 = vld [vmem:[#allocation13] sm:$0x1]
    %v1434 = vperm.slane %v1432, 0
    %1436 = vmatpush.msra.mxu0 %v1431
    %1437 = vmatpush.msra.mxu0 %v1430
    %1438 = vmatpush.msra.mxu0 %v1429
    %1439 = vmatpush.msra.mxu0 %v1428
    %1440 = vmatpush.msra.mxu0 %v1427
    %1441 = vmatpush.msra.mxu0 %v1426
    %1442 = vmatpush.msra.mxu0 %v1425
    %1443 = vmatpush.msra.mxu0 %v1424
    %1444 = vmatpush.msra.mxu0 %v1423
    %1445 = vmatpush.msra.mxu0 %v1422
    %1446 = vmatpush.msra.mxu0 %v1421
    %1447 = vmatpush.msra.mxu0 %v1420
    %1448 = vmatpush.msra.mxu0 %v1419
    %1449 = vmatpush.msra.mxu0 %v1418
    %1450 = vmatpush.msra.mxu0 %v1417
    %1451 = vmatpush.msra.mxu0 %v1416
    %1452 = vmatmul.f32.gmra.mxu0 %v1414
    %v1453 = vpop.f32.mrf.mxu0
    %v1454 = vadd.f32 %v1434, %v1453
    %1455 = vmatmul.f32.gmra.mxu0 %v1415
    %v1456 = vpop.f32.mrf.mxu0
    %v1457 = vadd.f32 %v1434, %v1456
    %1458 = vdwg.mxu0
    %1459 = vst [vmem:[#allocation14] sm:$0xff] %v1454
    %1460 = vst [vmem:[#allocation14 + $0x8] sm:$0xff] %v1457
    // Predicated region
    $region58: #{tpu_custom_call.1} parent=1 // pred_check
      _
    $region59: #{tpu_custom_call.1} parent=1 // pred_check_branch
      %1462 = sbr.rel (0) target = $region61
    $region60: #{tpu_custom_call.1} parent=1 // pred_region
      %1464 = vsyncadd [#allocation4], 0
      %s1465 = sshll.u32 [#allocation14], 4
      %s1466 = int_to_ptr.vmem [resolvable:$true] %s1465
      %s1467 = sshll.u32 %s7, 4
      %s1468 = int_to_ptr.hbm [resolvable:$true] %s1467
      %1473 = dma.vmem_to_hbm [thread:$0]  %s1466, 256, %s1468, [#allocation4], 128, 128, 8
    $region61: #{tpu_custom_call.1} parent=1 // pred_fallthru
      _
    // Predicated region
    $region62: #{tpu_custom_call.1} parent=1 // pred_check
      _
    $region63: #{tpu_custom_call.1} parent=1 // pred_check_branch
      %1475 = sbr.rel (0) target = $region65
    $region64: #{tpu_custom_call.1} parent=1 // pred_region
      %1477 = dma.done [#allocation4], 256
    $region65: #{tpu_custom_call.1} parent=1 // pred_fallthru
      _
    %1478 = vsyncpa [#allocation3], 1
    %1479 = vsyncpa [#allocation6], 1
    %1480 = vsyncpa [#allocation9], 1
    %1481 = vsyncpa [#allocation12], 1
    %1482 = vsyncpa [#allocation4], 1

</llo_original>
